<compile_context>
chip_gen: v5e
topology: v5e:2x2
jax: 0.10.0
libtpu: 0.0.40
codegen_flags: <defaults>
</compile_context>

<pallas_src>
import functools

import jax
import jax.numpy as jnp
from jax.experimental import pallas as pl
from jax.experimental.pallas import tpu as pltpu

# Model hyperparameters (match the PyTorch module defaults)
NUM_CELLS = 3
NUM_NODES = 4
NUM_OPS = 10
HIDDEN = 64
NUM_CLASSES = 2
EDGES_PER_CELL = sum(range(1, NUM_NODES + 1))   # 10
TOTAL_EDGES = NUM_CELLS * EDGES_PER_CELL        # 30
BN_EPS = 1e-5


def _forward_kernel(xw_ref, sw_ref, sb_ref, wmix_ref, nbias_ref, out_ref, slab_ref):
    """One block of TB batch elements per grid step.

    xw_ref    : (TB*L, 3*Cin)        bf16  stem conv windows (3 k-taps concat on channels)
    sw_ref    : (3*Cin, 64)          bf16  stem conv weight (BN scale folded in)
    sb_ref    : (1, 64)              f32   stem bias (BN folded in)
    wmix_ref  : (30*64, 64)          bf16  softmax(alpha)-mixed 1x1-op weights (edges on rows)
    nbias_ref : (12, 64)             f32   per-node bias (sum of mixed biases over in-edges)
    out_ref   : (TB, 64)             f32   mean-pooled features (64->2 classifier outside)
    slab_ref  : (TB*L, 4*64) scratch bf16  persistent per-cell state slab (states 0..3)
    """
    tb = out_ref.shape[0]
    m = xw_ref.shape[0]
    length = m // tb

    # ---- stem: Conv1d(k=3, pad=1) + folded BN + ReLU as one matmul ----
    h = jnp.dot(xw_ref[...], sw_ref[...], preferred_element_type=jnp.float32)
    h = jnp.maximum(h + sb_ref[...], 0.0)                              # (M, 64) f32

    # ---- DARTS cells: per node, one K-fused matmul over all incoming states ----
    # State slab replaces repeated jnp.concatenate: state j lives at columns [j*64,(j+1)*64).
    e = 0
    node_f32 = h
    for cell in range(NUM_CELLS):
        slab_ref[:, 0:HIDDEN] = h.astype(jnp.bfloat16)                 # state 0 = cell input
        for node in range(NUM_NODES):
            n_in = node + 1
            x_cat = slab_ref[:, : n_in * HIDDEN]                       # (M, n_in*64) bf16
            # weights for this node's edges are contiguous rows of the flattened wmix
            w_cat = wmix_ref[e * HIDDEN:(e + n_in) * HIDDEN, :]        # (n_in*64, 64) bf16
            acc = jnp.dot(x_cat, w_cat, preferred_element_type=jnp.float32)
            idx = cell * NUM_NODES + node
            node_f32 = jnp.maximum(acc + nbias_ref[idx:idx + 1, :], 0.0)
            if node < NUM_NODES - 1:
                slab_ref[:, (node + 1) * HIDDEN:(node + 2) * HIDDEN] = (
                    node_f32.astype(jnp.bfloat16))
            e += n_in
        h = node_f32                                                   # cell output = last node

    # ---- AdaptiveAvgPool1d(1): mean over length per batch element ----
    out_ref[...] = jnp.mean(h.reshape(tb, length, HIDDEN), axis=1)


def init_params(key, input_channels):
    """Deterministic synthetic parameters (shapes implied by the PyTorch __init__)."""
    ks = jax.random.split(key, 6)
    p = {}
    p["stem_w"] = 0.1 * jax.random.normal(ks[0], (3, input_channels, HIDDEN), jnp.float32)
    p["stem_b"] = 0.1 * jax.random.normal(ks[1], (HIDDEN,), jnp.float32)
    p["bn_gamma"] = jnp.ones((HIDDEN,), jnp.float32)
    p["bn_beta"] = jnp.zeros((HIDDEN,), jnp.float32)
    p["bn_mean"] = jnp.zeros((HIDDEN,), jnp.float32)
    p["bn_var"] = jnp.ones((HIDDEN,), jnp.float32)
    p["wops"] = 0.05 * jax.random.normal(ks[2], (TOTAL_EDGES, NUM_OPS, HIDDEN, HIDDEN), jnp.float32)
    p["bops"] = 0.05 * jax.random.normal(ks[3], (TOTAL_EDGES, NUM_OPS, 1, HIDDEN), jnp.float32)
    p["alphas"] = 0.001 * jax.random.normal(ks[4], (TOTAL_EDGES, NUM_OPS), jnp.float32)
    p["clf_w"] = 0.1 * jax.random.normal(ks[5], (NUM_CLASSES, HIDDEN), jnp.float32)
    p["clf_b"] = jnp.zeros((NUM_CLASSES,), jnp.float32)
    return p


def _select_tb(batch, length, channels, tb):
    """Pick batch-block so each grid step sees ~2048 rows, within a ~24 MiB VMEM budget."""
    if tb is not None:
        return tb
    # rough per-row VMEM footprint (bytes): double-buffered bf16 input window,
    # bf16 state slab, a few f32 working copies of the (row, 64) activation.
    per_row = 2 * (3 * channels * 2) + NUM_NODES * HIDDEN * 2 + 4 * HIDDEN * 4
    budget = 24 * 1024 * 1024
    max_rows = max(length, budget // per_row)
    target_rows = max(length, min(2048, max_rows))
    tb = max(1, target_rows // length)
    if tb >= batch:
        return batch                      # single grid step; blocks == full arrays
    return max(8, (tb // 8) * 8)          # multi-step grid: keep blocks 8-row aligned


@functools.partial(jax.jit, static_argnames=("input_channels", "tb"))
def deepfake_forward(x, params, *, input_channels, tb=None):
    # Mirror the PyTorch shape handling: accept (B, C, L) or (B, L, C).
    if x.shape[1] != input_channels:
        x = jnp.transpose(x, (0, 2, 1))                     # -> (B, C, L)
    B, C, L = x.shape

    tb = _select_tb(B, L, C, tb)

    # channels-last + conv(k=3, pad=1) windows concatenated along channels
    x_nlc = jnp.transpose(x, (0, 2, 1))                     # (B, L, C)
    x_pad = jnp.pad(x_nlc, ((0, 0), (1, 1), (0, 0)))        # (B, L+2, C)
    x_win = jnp.concatenate([x_pad[:, k:k + L, :] for k in range(3)], axis=-1)  # (B, L, 3C)

    # pad batch to a multiple of tb (padded rows are dropped after the kernel)
    b_pad = ((B + tb - 1) // tb) * tb
    if b_pad != B:
        x_win = jnp.pad(x_win, ((0, b_pad - B), (0, 0), (0, 0)))
    x_win = x_win.reshape(b_pad * L, 3 * C).astype(jnp.bfloat16)

    # Fold eval-mode BatchNorm1d into the stem conv.
    scale = params["bn_gamma"] / jnp.sqrt(params["bn_var"] + BN_EPS)
    stem_w = (params["stem_w"] * scale[None, None, :]).reshape(3 * C, HIDDEN).astype(jnp.bfloat16)
    stem_b = ((params["stem_b"] - params["bn_mean"]) * scale
              + params["bn_beta"]).reshape(1, HIDDEN).astype(jnp.float32)

    # DARTS continuous relaxation: pre-mix the candidate ops with softmax(alpha) (hoisted).
    edge_w = jax.nn.softmax(params["alphas"], axis=1)                        # (30, 10)
    wmix = jnp.einsum("eo,eoij->eij", edge_w, params["wops"])                # (30, 64, 64)
    bmix = jnp.einsum("eo,eoj->ej", edge_w, params["bops"][:, :, 0, :])      # (30, 64)
    wmix_flat = wmix.reshape(TOTAL_EDGES * HIDDEN, HIDDEN).astype(jnp.bfloat16)

    # Per-node bias = sum of the mixed biases over the node's incoming edges.
    nbias_rows = []
    e = 0
    for _cell in range(NUM_CELLS):
        for node in range(NUM_NODES):
            n_in = node + 1
            nbias_rows.append(jnp.sum(bmix[e:e + n_in], axis=0))
            e += n_in
    nbias = jnp.stack(nbias_rows, axis=0).astype(jnp.float32)                # (12, 64)

    pooled = pl.pallas_call(
        _forward_kernel,
        out_shape=jax.ShapeDtypeStruct((b_pad, HIDDEN), jnp.float32),
        grid=(b_pad // tb,),
        in_specs=[
            pl.BlockSpec((tb * L, 3 * C), lambda b: (b, 0)),
            pl.BlockSpec((3 * C, HIDDEN), lambda b: (0, 0)),
            pl.BlockSpec((1, HIDDEN), lambda b: (0, 0)),
            pl.BlockSpec((TOTAL_EDGES * HIDDEN, HIDDEN), lambda b: (0, 0)),
            pl.BlockSpec((NUM_CELLS * NUM_NODES, HIDDEN), lambda b: (0, 0)),
        ],
        out_specs=pl.BlockSpec((tb, HIDDEN), lambda b: (b, 0)),
        scratch_shapes=[pltpu.VMEM((tb * L, NUM_NODES * HIDDEN), jnp.bfloat16)],
        compiler_params=pltpu.CompilerParams(
            dimension_semantics=("parallel",),
            vmem_limit_bytes=48 * 1024 * 1024,
        ),
    )(x_win, stem_w, stem_b, wmix_flat, nbias)

    # AdaptiveAvgPool output -> Linear(64 -> 2) done lane-efficiently in XLA.
    pooled = pooled[:B]
    logits = pooled @ params["clf_w"].T + params["clf_b"][None, :]
    return logits


if __name__ == "__main__":
    key = jax.random.PRNGKey(0)
    k_x, k_p = jax.random.split(key)

    input_channels = 4
    B, L = 2, 16
    # PyTorch-style NCL input, like nn.Conv1d expects.
    x = jax.random.normal(k_x, (B, input_channels, L), jnp.float32)

    params = init_params(k_p, input_channels)
    out = deepfake_forward(x, params, input_channels=input_channels)
    out = jax.block_until_ready(out)
    assert out.shape == (B, NUM_CLASSES), out.shape
    print("KERNEL_OK")
</pallas_src>

<mosaic_0001>
module attributes {stable_mosaic.version = 11 : i64} {
  func.func @_forward_kernel(%arg0: i32, %arg1: memref<32x12xbf16, #tpu.memory_space<vmem>>, %arg2: memref<12x64xbf16, #tpu.memory_space<vmem>>, %arg3: memref<1x64xf32, #tpu.memory_space<vmem>>, %arg4: memref<1920x64xbf16, #tpu.memory_space<vmem>>, %arg5: memref<12x64xf32, #tpu.memory_space<vmem>>, %arg6: memref<2x64xf32, #tpu.memory_space<vmem>>, %arg7: memref<32x256xbf16, #tpu.memory_space<vmem>>) attributes {dimension_semantics = [#tpu.dimension_semantics<parallel>], iteration_bounds = array<i64: 1>, scalar_prefetch = 0 : i64, scratch_operands = 1 : i64, tpu.core_type = #tpu.core_type<tc>, window_params = [{transform_indices = @transform_0, window_bounds = array<i64: 32, 12>}, {pipeline_mode = #tpu.pipeline_mode<synchronous>, transform_indices = @transform_1, window_bounds = array<i64: 12, 64>}, {pipeline_mode = #tpu.pipeline_mode<synchronous>, transform_indices = @transform_2, window_bounds = array<i64: 1, 64>}, {pipeline_mode = #tpu.pipeline_mode<synchronous>, transform_indices = @transform_3, window_bounds = array<i64: 1920, 64>}, {pipeline_mode = #tpu.pipeline_mode<synchronous>, transform_indices = @transform_4, window_bounds = array<i64: 12, 64>}, {transform_indices = @transform_5, window_bounds = array<i64: 2, 64>}]} {
    %c0 = arith.constant 0 : index
    %c0_0 = arith.constant 0 : index
    %0 = vector.load %arg1[%c0, %c0_0] : memref<32x12xbf16, #tpu.memory_space<vmem>>, vector<32x12xbf16>
    %c0_1 = arith.constant 0 : index
    %c0_2 = arith.constant 0 : index
    %1 = vector.load %arg2[%c0_1, %c0_2] : memref<12x64xbf16, #tpu.memory_space<vmem>>, vector<12x64xbf16>
    %cst = arith.constant dense<0.000000e+00> : vector<32x64xf32>
    %2 = tpu.matmul %0, %1, %cst {dimension_numbers = #tpu.dot_dimension_numbers<[1], [0], [0], [1], [0, 0, 1, 1], [], []>} : vector<32x12xbf16>, vector<12x64xbf16>, vector<32x64xf32> -> vector<32x64xf32>
    %c0_3 = arith.constant 0 : index
    %c0_4 = arith.constant 0 : index
    %3 = vector.load %arg3[%c0_3, %c0_4] : memref<1x64xf32, #tpu.memory_space<vmem>>, vector<1x64xf32>
    %4 = vector.broadcast %3 : vector<1x64xf32> to vector<32x64xf32>
    %5 = arith.addf %2, %4 : vector<32x64xf32>
    %cst_5 = arith.constant 0.000000e+00 : f32
    %6 = vector.broadcast %cst_5 : f32 to vector<32x64xf32>
    %7 = arith.maximumf %5, %6 : vector<32x64xf32>
    %8 = arith.truncf %7 : vector<32x64xf32> to vector<32x64xbf16>
    %c0_6 = arith.constant 0 : index
    %c0_7 = arith.constant 0 : index
    %9 = vector.load %arg7[%c0_6, %c0_7] : memref<32x256xbf16, #tpu.memory_space<vmem>>, vector<32x64xbf16>
    tpu.vector_store %arg7[%c0_6, %c0_7], %8 {strides = array<i32>} : memref<32x256xbf16, #tpu.memory_space<vmem>>, vector<32x64xbf16>,
    %c0_8 = arith.constant 0 : index
    %c0_9 = arith.constant 0 : index
    %10 = vector.load %arg7[%c0_8, %c0_9] : memref<32x256xbf16, #tpu.memory_space<vmem>>, vector<32x64xbf16>
    %c0_10 = arith.constant 0 : index
    %c0_11 = arith.constant 0 : index
    %11 = vector.load %arg4[%c0_10, %c0_11] : memref<1920x64xbf16, #tpu.memory_space<vmem>>, vector<64x64xbf16>
    %cst_12 = arith.constant dense<0.000000e+00> : vector<32x64xf32>
    %12 = tpu.matmul %10, %11, %cst_12 {dimension_numbers = #tpu.dot_dimension_numbers<[1], [0], [0], [1], [0, 0, 1, 1], [], []>} : vector<32x64xbf16>, vector<64x64xbf16>, vector<32x64xf32> -> vector<32x64xf32>
    %c0_13 = arith.constant 0 : index
    %c0_14 = arith.constant 0 : index
    %13 = vector.load %arg5[%c0_13, %c0_14] : memref<12x64xf32, #tpu.memory_space<vmem>>, vector<1x64xf32>
    %14 = vector.broadcast %13 : vector<1x64xf32> to vector<32x64xf32>
    %15 = arith.addf %12, %14 : vector<32x64xf32>
    %cst_15 = arith.constant 0.000000e+00 : f32
    %16 = vector.broadcast %cst_15 : f32 to vector<32x64xf32>
    %17 = arith.maximumf %15, %16 : vector<32x64xf32>
    %18 = arith.truncf %17 : vector<32x64xf32> to vector<32x64xbf16>
    %c0_16 = arith.constant 0 : index
    %c64 = arith.constant 64 : index
    %19 = vector.load %arg7[%c0_16, %c64] : memref<32x256xbf16, #tpu.memory_space<vmem>>, vector<32x64xbf16>
    tpu.vector_store %arg7[%c0_16, %c64], %18 {strides = array<i32>} : memref<32x256xbf16, #tpu.memory_space<vmem>>, vector<32x64xbf16>,
    %c0_17 = arith.constant 0 : index
    %c0_18 = arith.constant 0 : index
    %20 = vector.load %arg7[%c0_17, %c0_18] : memref<32x256xbf16, #tpu.memory_space<vmem>>, vector<32x128xbf16>
    %c64_19 = arith.constant 64 : index
    %c0_20 = arith.constant 0 : index
    %21 = vector.load %arg4[%c64_19, %c0_20] : memref<1920x64xbf16, #tpu.memory_space<vmem>>, vector<128x64xbf16>
    %cst_21 = arith.constant dense<0.000000e+00> : vector<32x64xf32>
    %22 = tpu.matmul %20, %21, %cst_21 {dimension_numbers = #tpu.dot_dimension_numbers<[1], [0], [0], [1], [0, 0, 1, 1], [], []>} : vector<32x128xbf16>, vector<128x64xbf16>, vector<32x64xf32> -> vector<32x64xf32>
    %c1 = arith.constant 1 : index
    %c0_22 = arith.constant 0 : index
    %23 = vector.load %arg5[%c1, %c0_22] : memref<12x64xf32, #tpu.memory_space<vmem>>, vector<1x64xf32>
    %24 = vector.broadcast %23 : vector<1x64xf32> to vector<32x64xf32>
    %25 = arith.addf %22, %24 : vector<32x64xf32>
    %cst_23 = arith.constant 0.000000e+00 : f32
    %26 = vector.broadcast %cst_23 : f32 to vector<32x64xf32>
    %27 = arith.maximumf %25, %26 : vector<32x64xf32>
    %28 = arith.truncf %27 : vector<32x64xf32> to vector<32x64xbf16>
    %c0_24 = arith.constant 0 : index
    %c128 = arith.constant 128 : index
    %29 = vector.load %arg7[%c0_24, %c128] : memref<32x256xbf16, #tpu.memory_space<vmem>>, vector<32x64xbf16>
    tpu.vector_store %arg7[%c0_24, %c128], %28 {strides = array<i32>} : memref<32x256xbf16, #tpu.memory_space<vmem>>, vector<32x64xbf16>,
    %c0_25 = arith.constant 0 : index
    %c0_26 = arith.constant 0 : index
    %30 = vector.load %arg7[%c0_25, %c0_26] : memref<32x256xbf16, #tpu.memory_space<vmem>>, vector<32x192xbf16>
    %c192 = arith.constant 192 : index
    %c0_27 = arith.constant 0 : index
    %31 = vector.load %arg4[%c192, %c0_27] : memref<1920x64xbf16, #tpu.memory_space<vmem>>, vector<192x64xbf16>
    %cst_28 = arith.constant dense<0.000000e+00> : vector<32x64xf32>
    %32 = tpu.matmul %30, %31, %cst_28 {dimension_numbers = #tpu.dot_dimension_numbers<[1], [0], [0], [1], [0, 0, 1, 1], [], []>} : vector<32x192xbf16>, vector<192x64xbf16>, vector<32x64xf32> -> vector<32x64xf32>
    %c2 = arith.constant 2 : index
    %c0_29 = arith.constant 0 : index
    %33 = vector.load %arg5[%c2, %c0_29] : memref<12x64xf32, #tpu.memory_space<vmem>>, vector<1x64xf32>
    %34 = vector.broadcast %33 : vector<1x64xf32> to vector<32x64xf32>
    %35 = arith.addf %32, %34 : vector<32x64xf32>
    %cst_30 = arith.constant 0.000000e+00 : f32
    %36 = vector.broadcast %cst_30 : f32 to vector<32x64xf32>
    %37 = arith.maximumf %35, %36 : vector<32x64xf32>
    %38 = arith.truncf %37 : vector<32x64xf32> to vector<32x64xbf16>
    %c0_31 = arith.constant 0 : index
    %c192_32 = arith.constant 192 : index
    %39 = vector.load %arg7[%c0_31, %c192_32] : memref<32x256xbf16, #tpu.memory_space<vmem>>, vector<32x64xbf16>
    tpu.vector_store %arg7[%c0_31, %c192_32], %38 {strides = array<i32>} : memref<32x256xbf16, #tpu.memory_space<vmem>>, vector<32x64xbf16>,
    %c0_33 = arith.constant 0 : index
    %c0_34 = arith.constant 0 : index
    %40 = vector.load %arg7[%c0_33, %c0_34] : memref<32x256xbf16, #tpu.memory_space<vmem>>, vector<32x256xbf16>
    %c384 = arith.constant 384 : index
    %c0_35 = arith.constant 0 : index
    %41 = vector.load %arg4[%c384, %c0_35] : memref<1920x64xbf16, #tpu.memory_space<vmem>>, vector<256x64xbf16>
    %cst_36 = arith.constant dense<0.000000e+00> : vector<32x64xf32>
    %42 = tpu.matmul %40, %41, %cst_36 {dimension_numbers = #tpu.dot_dimension_numbers<[1], [0], [0], [1], [0, 0, 1, 1], [], []>} : vector<32x256xbf16>, vector<256x64xbf16>, vector<32x64xf32> -> vector<32x64xf32>
    %c3 = arith.constant 3 : index
    %c0_37 = arith.constant 0 : index
    %43 = vector.load %arg5[%c3, %c0_37] : memref<12x64xf32, #tpu.memory_space<vmem>>, vector<1x64xf32>
    %44 = vector.broadcast %43 : vector<1x64xf32> to vector<32x64xf32>
    %45 = arith.addf %42, %44 : vector<32x64xf32>
    %cst_38 = arith.constant 0.000000e+00 : f32
    %46 = vector.broadcast %cst_38 : f32 to vector<32x64xf32>
    %47 = arith.maximumf %45, %46 : vector<32x64xf32>
    %48 = arith.truncf %47 : vector<32x64xf32> to vector<32x64xbf16>
    %c0_39 = arith.constant 0 : index
    %c0_40 = arith.constant 0 : index
    %49 = vector.load %arg7[%c0_39, %c0_40] : memref<32x256xbf16, #tpu.memory_space<vmem>>, vector<32x64xbf16>
    tpu.vector_store %arg7[%c0_39, %c0_40], %48 {strides = array<i32>} : memref<32x256xbf16, #tpu.memory_space<vmem>>, vector<32x64xbf16>,
    %c0_41 = arith.constant 0 : index
    %c0_42 = arith.constant 0 : index
    %50 = vector.load %arg7[%c0_41, %c0_42] : memref<32x256xbf16, #tpu.memory_space<vmem>>, vector<32x64xbf16>
    %c640 = arith.constant 640 : index
    %c0_43 = arith.constant 0 : index
    %51 = vector.load %arg4[%c640, %c0_43] : memref<1920x64xbf16, #tpu.memory_space<vmem>>, vector<64x64xbf16>
    %cst_44 = arith.constant dense<0.000000e+00> : vector<32x64xf32>
    %52 = tpu.matmul %50, %51, %cst_44 {dimension_numbers = #tpu.dot_dimension_numbers<[1], [0], [0], [1], [0, 0, 1, 1], [], []>} : vector<32x64xbf16>, vector<64x64xbf16>, vector<32x64xf32> -> vector<32x64xf32>
    %c4 = arith.constant 4 : index
    %c0_45 = arith.constant 0 : index
    %53 = vector.load %arg5[%c4, %c0_45] : memref<12x64xf32, #tpu.memory_space<vmem>>, vector<1x64xf32>
    %54 = vector.broadcast %53 : vector<1x64xf32> to vector<32x64xf32>
    %55 = arith.addf %52, %54 : vector<32x64xf32>
    %cst_46 = arith.constant 0.000000e+00 : f32
    %56 = vector.broadcast %cst_46 : f32 to vector<32x64xf32>
    %57 = arith.maximumf %55, %56 : vector<32x64xf32>
    %58 = arith.truncf %57 : vector<32x64xf32> to vector<32x64xbf16>
    %c0_47 = arith.constant 0 : index
    %c64_48 = arith.constant 64 : index
    %59 = vector.load %arg7[%c0_47, %c64_48] : memref<32x256xbf16, #tpu.memory_space<vmem>>, vector<32x64xbf16>
    tpu.vector_store %arg7[%c0_47, %c64_48], %58 {strides = array<i32>} : memref<32x256xbf16, #tpu.memory_space<vmem>>, vector<32x64xbf16>,
    %c0_49 = arith.constant 0 : index
    %c0_50 = arith.constant 0 : index
    %60 = vector.load %arg7[%c0_49, %c0_50] : memref<32x256xbf16, #tpu.memory_space<vmem>>, vector<32x128xbf16>
    %c704 = arith.constant 704 : index
    %c0_51 = arith.constant 0 : index
    %61 = vector.load %arg4[%c704, %c0_51] : memref<1920x64xbf16, #tpu.memory_space<vmem>>, vector<128x64xbf16>
    %cst_52 = arith.constant dense<0.000000e+00> : vector<32x64xf32>
    %62 = tpu.matmul %60, %61, %cst_52 {dimension_numbers = #tpu.dot_dimension_numbers<[1], [0], [0], [1], [0, 0, 1, 1], [], []>} : vector<32x128xbf16>, vector<128x64xbf16>, vector<32x64xf32> -> vector<32x64xf32>
    %c5 = arith.constant 5 : index
    %c0_53 = arith.constant 0 : index
    %63 = vector.load %arg5[%c5, %c0_53] : memref<12x64xf32, #tpu.memory_space<vmem>>, vector<1x64xf32>
    %64 = vector.broadcast %63 : vector<1x64xf32> to vector<32x64xf32>
    %65 = arith.addf %62, %64 : vector<32x64xf32>
    %cst_54 = arith.constant 0.000000e+00 : f32
    %66 = vector.broadcast %cst_54 : f32 to vector<32x64xf32>
    %67 = arith.maximumf %65, %66 : vector<32x64xf32>
    %68 = arith.truncf %67 : vector<32x64xf32> to vector<32x64xbf16>
    %c0_55 = arith.constant 0 : index
    %c128_56 = arith.constant 128 : index
    %69 = vector.load %arg7[%c0_55, %c128_56] : memref<32x256xbf16, #tpu.memory_space<vmem>>, vector<32x64xbf16>
    tpu.vector_store %arg7[%c0_55, %c128_56], %68 {strides = array<i32>} : memref<32x256xbf16, #tpu.memory_space<vmem>>, vector<32x64xbf16>,
    %c0_57 = arith.constant 0 : index
    %c0_58 = arith.constant 0 : index
    %70 = vector.load %arg7[%c0_57, %c0_58] : memref<32x256xbf16, #tpu.memory_space<vmem>>, vector<32x192xbf16>
    %c832 = arith.constant 832 : index
    %c0_59 = arith.constant 0 : index
    %71 = vector.load %arg4[%c832, %c0_59] : memref<1920x64xbf16, #tpu.memory_space<vmem>>, vector<192x64xbf16>
    %cst_60 = arith.constant dense<0.000000e+00> : vector<32x64xf32>
    %72 = tpu.matmul %70, %71, %cst_60 {dimension_numbers = #tpu.dot_dimension_numbers<[1], [0], [0], [1], [0, 0, 1, 1], [], []>} : vector<32x192xbf16>, vector<192x64xbf16>, vector<32x64xf32> -> vector<32x64xf32>
    %c6 = arith.constant 6 : index
    %c0_61 = arith.constant 0 : index
    %73 = vector.load %arg5[%c6, %c0_61] : memref<12x64xf32, #tpu.memory_space<vmem>>, vector<1x64xf32>
    %74 = vector.broadcast %73 : vector<1x64xf32> to vector<32x64xf32>
    %75 = arith.addf %72, %74 : vector<32x64xf32>
    %cst_62 = arith.constant 0.000000e+00 : f32
    %76 = vector.broadcast %cst_62 : f32 to vector<32x64xf32>
    %77 = arith.maximumf %75, %76 : vector<32x64xf32>
    %78 = arith.truncf %77 : vector<32x64xf32> to vector<32x64xbf16>
    %c0_63 = arith.constant 0 : index
    %c192_64 = arith.constant 192 : index
    %79 = vector.load %arg7[%c0_63, %c192_64] : memref<32x256xbf16, #tpu.memory_space<vmem>>, vector<32x64xbf16>
    tpu.vector_store %arg7[%c0_63, %c192_64], %78 {strides = array<i32>} : memref<32x256xbf16, #tpu.memory_space<vmem>>, vector<32x64xbf16>,
    %c0_65 = arith.constant 0 : index
    %c0_66 = arith.constant 0 : index
    %80 = vector.load %arg7[%c0_65, %c0_66] : memref<32x256xbf16, #tpu.memory_space<vmem>>, vector<32x256xbf16>
    %c1024 = arith.constant 1024 : index
    %c0_67 = arith.constant 0 : index
    %81 = vector.load %arg4[%c1024, %c0_67] : memref<1920x64xbf16, #tpu.memory_space<vmem>>, vector<256x64xbf16>
    %cst_68 = arith.constant dense<0.000000e+00> : vector<32x64xf32>
    %82 = tpu.matmul %80, %81, %cst_68 {dimension_numbers = #tpu.dot_dimension_numbers<[1], [0], [0], [1], [0, 0, 1, 1], [], []>} : vector<32x256xbf16>, vector<256x64xbf16>, vector<32x64xf32> -> vector<32x64xf32>
    %c7 = arith.constant 7 : index
    %c0_69 = arith.constant 0 : index
    %83 = vector.load %arg5[%c7, %c0_69] : memref<12x64xf32, #tpu.memory_space<vmem>>, vector<1x64xf32>
    %84 = vector.broadcast %83 : vector<1x64xf32> to vector<32x64xf32>
    %85 = arith.addf %82, %84 : vector<32x64xf32>
    %cst_70 = arith.constant 0.000000e+00 : f32
    %86 = vector.broadcast %cst_70 : f32 to vector<32x64xf32>
    %87 = arith.maximumf %85, %86 : vector<32x64xf32>
    %88 = arith.truncf %87 : vector<32x64xf32> to vector<32x64xbf16>
    %c0_71 = arith.constant 0 : index
    %c0_72 = arith.constant 0 : index
    %89 = vector.load %arg7[%c0_71, %c0_72] : memref<32x256xbf16, #tpu.memory_space<vmem>>, vector<32x64xbf16>
    tpu.vector_store %arg7[%c0_71, %c0_72], %88 {strides = array<i32>} : memref<32x256xbf16, #tpu.memory_space<vmem>>, vector<32x64xbf16>,
    %c0_73 = arith.constant 0 : index
    %c0_74 = arith.constant 0 : index
    %90 = vector.load %arg7[%c0_73, %c0_74] : memref<32x256xbf16, #tpu.memory_space<vmem>>, vector<32x64xbf16>
    %c1280 = arith.constant 1280 : index
    %c0_75 = arith.constant 0 : index
    %91 = vector.load %arg4[%c1280, %c0_75] : memref<1920x64xbf16, #tpu.memory_space<vmem>>, vector<64x64xbf16>
    %cst_76 = arith.constant dense<0.000000e+00> : vector<32x64xf32>
    %92 = tpu.matmul %90, %91, %cst_76 {dimension_numbers = #tpu.dot_dimension_numbers<[1], [0], [0], [1], [0, 0, 1, 1], [], []>} : vector<32x64xbf16>, vector<64x64xbf16>, vector<32x64xf32> -> vector<32x64xf32>
    %c8 = arith.constant 8 : index
    %c0_77 = arith.constant 0 : index
    %93 = vector.load %arg5[%c8, %c0_77] : memref<12x64xf32, #tpu.memory_space<vmem>>, vector<1x64xf32>
    %94 = vector.broadcast %93 : vector<1x64xf32> to vector<32x64xf32>
    %95 = arith.addf %92, %94 : vector<32x64xf32>
    %cst_78 = arith.constant 0.000000e+00 : f32
    %96 = vector.broadcast %cst_78 : f32 to vector<32x64xf32>
    %97 = arith.maximumf %95, %96 : vector<32x64xf32>
    %98 = arith.truncf %97 : vector<32x64xf32> to vector<32x64xbf16>
    %c0_79 = arith.constant 0 : index
    %c64_80 = arith.constant 64 : index
    %99 = vector.load %arg7[%c0_79, %c64_80] : memref<32x256xbf16, #tpu.memory_space<vmem>>, vector<32x64xbf16>
    tpu.vector_store %arg7[%c0_79, %c64_80], %98 {strides = array<i32>} : memref<32x256xbf16, #tpu.memory_space<vmem>>, vector<32x64xbf16>,
    %c0_81 = arith.constant 0 : index
    %c0_82 = arith.constant 0 : index
    %100 = vector.load %arg7[%c0_81, %c0_82] : memref<32x256xbf16, #tpu.memory_space<vmem>>, vector<32x128xbf16>
    %c1344 = arith.constant 1344 : index
    %c0_83 = arith.constant 0 : index
    %101 = vector.load %arg4[%c1344, %c0_83] : memref<1920x64xbf16, #tpu.memory_space<vmem>>, vector<128x64xbf16>
    %cst_84 = arith.constant dense<0.000000e+00> : vector<32x64xf32>
    %102 = tpu.matmul %100, %101, %cst_84 {dimension_numbers = #tpu.dot_dimension_numbers<[1], [0], [0], [1], [0, 0, 1, 1], [], []>} : vector<32x128xbf16>, vector<128x64xbf16>, vector<32x64xf32> -> vector<32x64xf32>
    %c9 = arith.constant 9 : index
    %c0_85 = arith.constant 0 : index
    %103 = vector.load %arg5[%c9, %c0_85] : memref<12x64xf32, #tpu.memory_space<vmem>>, vector<1x64xf32>
    %104 = vector.broadcast %103 : vector<1x64xf32> to vector<32x64xf32>
    %105 = arith.addf %102, %104 : vector<32x64xf32>
    %cst_86 = arith.constant 0.000000e+00 : f32
    %106 = vector.broadcast %cst_86 : f32 to vector<32x64xf32>
    %107 = arith.maximumf %105, %106 : vector<32x64xf32>
    %108 = arith.truncf %107 : vector<32x64xf32> to vector<32x64xbf16>
    %c0_87 = arith.constant 0 : index
    %c128_88 = arith.constant 128 : index
    %109 = vector.load %arg7[%c0_87, %c128_88] : memref<32x256xbf16, #tpu.memory_space<vmem>>, vector<32x64xbf16>
    tpu.vector_store %arg7[%c0_87, %c128_88], %108 {strides = array<i32>} : memref<32x256xbf16, #tpu.memory_space<vmem>>, vector<32x64xbf16>,
    %c0_89 = arith.constant 0 : index
    %c0_90 = arith.constant 0 : index
    %110 = vector.load %arg7[%c0_89, %c0_90] : memref<32x256xbf16, #tpu.memory_space<vmem>>, vector<32x192xbf16>
    %c1472 = arith.constant 1472 : index
    %c0_91 = arith.constant 0 : index
    %111 = vector.load %arg4[%c1472, %c0_91] : memref<1920x64xbf16, #tpu.memory_space<vmem>>, vector<192x64xbf16>
    %cst_92 = arith.constant dense<0.000000e+00> : vector<32x64xf32>
    %112 = tpu.matmul %110, %111, %cst_92 {dimension_numbers = #tpu.dot_dimension_numbers<[1], [0], [0], [1], [0, 0, 1, 1], [], []>} : vector<32x192xbf16>, vector<192x64xbf16>, vector<32x64xf32> -> vector<32x64xf32>
    %c10 = arith.constant 10 : index
    %c0_93 = arith.constant 0 : index
    %113 = vector.load %arg5[%c10, %c0_93] : memref<12x64xf32, #tpu.memory_space<vmem>>, vector<1x64xf32>
    %114 = vector.broadcast %113 : vector<1x64xf32> to vector<32x64xf32>
    %115 = arith.addf %112, %114 : vector<32x64xf32>
    %cst_94 = arith.constant 0.000000e+00 : f32
    %116 = vector.broadcast %cst_94 : f32 to vector<32x64xf32>
    %117 = arith.maximumf %115, %116 : vector<32x64xf32>
    %118 = arith.truncf %117 : vector<32x64xf32> to vector<32x64xbf16>
    %c0_95 = arith.constant 0 : index
    %c192_96 = arith.constant 192 : index
    %119 = vector.load %arg7[%c0_95, %c192_96] : memref<32x256xbf16, #tpu.memory_space<vmem>>, vector<32x64xbf16>
    tpu.vector_store %arg7[%c0_95, %c192_96], %118 {strides = array<i32>} : memref<32x256xbf16, #tpu.memory_space<vmem>>, vector<32x64xbf16>,
    %c0_97 = arith.constant 0 : index
    %c0_98 = arith.constant 0 : index
    %120 = vector.load %arg7[%c0_97, %c0_98] : memref<32x256xbf16, #tpu.memory_space<vmem>>, vector<32x256xbf16>
    %c1664 = arith.constant 1664 : index
    %c0_99 = arith.constant 0 : index
    %121 = vector.load %arg4[%c1664, %c0_99] : memref<1920x64xbf16, #tpu.memory_space<vmem>>, vector<256x64xbf16>
    %cst_100 = arith.constant dense<0.000000e+00> : vector<32x64xf32>
    %122 = tpu.matmul %120, %121, %cst_100 {dimension_numbers = #tpu.dot_dimension_numbers<[1], [0], [0], [1], [0, 0, 1, 1], [], []>} : vector<32x256xbf16>, vector<256x64xbf16>, vector<32x64xf32> -> vector<32x64xf32>
    %c11 = arith.constant 11 : index
    %c0_101 = arith.constant 0 : index
    %123 = vector.load %arg5[%c11, %c0_101] : memref<12x64xf32, #tpu.memory_space<vmem>>, vector<1x64xf32>
    %124 = vector.broadcast %123 : vector<1x64xf32> to vector<32x64xf32>
    %125 = arith.addf %122, %124 : vector<32x64xf32>
    %cst_102 = arith.constant 0.000000e+00 : f32
    %126 = vector.broadcast %cst_102 : f32 to vector<32x64xf32>
    %127 = arith.maximumf %125, %126 : vector<32x64xf32>
    %128 = vector.shape_cast %127 : vector<32x64xf32> to vector<2x16x64xf32>
    %cst_103 = arith.constant dense<0.000000e+00> : vector<2x64xf32>
    %129 = vector.multi_reduction <add>, %128, %cst_103 [1] : vector<2x16x64xf32> to vector<2x64xf32>
    %cst_104 = arith.constant 1.600000e+01 : f32
    %130 = vector.broadcast %cst_104 : f32 to vector<2x64xf32>
    %131 = arith.divf %129, %130 : vector<2x64xf32>
    %c0_105 = arith.constant 0 : index
    %c0_106 = arith.constant 0 : index
    %132 = vector.load %arg6[%c0_105, %c0_106] : memref<2x64xf32, #tpu.memory_space<vmem>>, vector<2x64xf32>
    tpu.vector_store %arg6[%c0_105, %c0_106], %131 {strides = array<i32>} : memref<2x64xf32, #tpu.memory_space<vmem>>, vector<2x64xf32>,
    return
  }
  func.func @transform_0(%arg0: i32) -> (i32, i32) {
    %c0_i32 = arith.constant 0 : i32
    %c0_i32_0 = arith.constant 0 : i32
    return %arg0, %c0_i32 : i32, i32
  }
  func.func @transform_1(%arg0: i32) -> (i32, i32) {
    %c0_i32 = arith.constant 0 : i32
    %c0_i32_0 = arith.constant 0 : i32
    %c0_i32_1 = arith.constant 0 : i32
    return %c0_i32, %c0_i32_0 : i32, i32
  }
  func.func @transform_2(%arg0: i32) -> (i32, i32) {
    %c0_i32 = arith.constant 0 : i32
    %c0_i32_0 = arith.constant 0 : i32
    %c0_i32_1 = arith.constant 0 : i32
    return %c0_i32, %c0_i32_0 : i32, i32
  }
  func.func @transform_3(%arg0: i32) -> (i32, i32) {
    %c0_i32 = arith.constant 0 : i32
    %c0_i32_0 = arith.constant 0 : i32
    %c0_i32_1 = arith.constant 0 : i32
    return %c0_i32, %c0_i32_0 : i32, i32
  }
  func.func @transform_4(%arg0: i32) -> (i32, i32) {
    %c0_i32 = arith.constant 0 : i32
    %c0_i32_0 = arith.constant 0 : i32
    %c0_i32_1 = arith.constant 0 : i32
    return %c0_i32, %c0_i32_0 : i32, i32
  }
  func.func @transform_5(%arg0: i32) -> (i32, i32) {
    %c0_i32 = arith.constant 0 : i32
    %c0_i32_0 = arith.constant 0 : i32
    return %arg0, %c0_i32 : i32, i32
  }
}

</mosaic_0001>

<llo_original>
// kernel: deepfake_forward.1
$region0: #{deepfake_forward.1}
  #allocation0 [shape = 'u32[]', space=smem, size = 0x4, offset = 0x4, fixed_abs, tag = 'smem constant byte address 0x4 - core index']
  #allocation1 [shape = 'u32[72,128]{1,0:T(1,128)}', space=vmem, size = 0x9000, scoped, tag = 'internal scratch']
  #allocation2 [shape = 'bf16[32,256]{1,0:T(8,128)(2,1)}', space=vmem, size = 0x4000, scoped, tag = 'scratch operand']
  %s0 = inlined_call_operand.vmem [shape: bf16[32,12], index: 0, kind: input, shape index: {}]
  %s1 = inlined_call_operand.vmem [shape: bf16[12,64], index: 1, kind: input, shape index: {}]
  %s2 = inlined_call_operand.vmem [shape: f32[1,64], index: 2, kind: input, shape index: {}]
  %s3 = inlined_call_operand.vmem [shape: bf16[1920,64], index: 3, kind: input, shape index: {}]
  %s4 = inlined_call_operand.vmem [shape: f32[12,64], index: 4, kind: input, shape index: {}]
  %s5 = inlined_call_operand.vmem [shape: f32[2,64], index: 5, kind: output, shape index: {}]
  %s6 = sld [smem:[#allocation0]]
  $region30: #{deepfake_forward.1} parent=0
    _
  %s8 = ssub.s32 1, %s6
  %s9 = scalar_select 0, %s8, %s6
  // Predicated region
  $region2: #{deepfake_forward.1} parent=0 // pred_check
    _
  $region3: #{deepfake_forward.1} parent=0 // pred_check_branch
    %11 = sbr.rel (0) target = $region5
  $region4: #{deepfake_forward.1} parent=0 // pred_region
    _
  $region5: #{deepfake_forward.1} parent=0 // pred_fallthru
    _
  // Predicated region
  $region6: #{deepfake_forward.1} parent=0 // pred_check
    _
  $region7: #{deepfake_forward.1} parent=0 // pred_check_branch
    %13 = sbr.rel (0) target = $region9
  $region8: #{deepfake_forward.1} parent=0 // pred_region
    _
  $region9: #{deepfake_forward.1} parent=0 // pred_fallthru
    _
  // Predicated region
  $region10: #{deepfake_forward.1} parent=0 // pred_check
    _
  $region11: #{deepfake_forward.1} parent=0 // pred_check_branch
    %15 = sbr.rel (0) target = $region13
  $region12: #{deepfake_forward.1} parent=0 // pred_region
    _
  $region13: #{deepfake_forward.1} parent=0 // pred_fallthru
    _
  // Predicated region
  $region14: #{deepfake_forward.1} parent=0 // pred_check
    _
  $region15: #{deepfake_forward.1} parent=0 // pred_check_branch
    %17 = sbr.rel (0) target = $region17
  $region16: #{deepfake_forward.1} parent=0 // pred_region
    _
  $region17: #{deepfake_forward.1} parent=0 // pred_fallthru
    _
  // Predicated region
  $region18: #{deepfake_forward.1} parent=0 // pred_check
    _
  $region19: #{deepfake_forward.1} parent=0 // pred_check_branch
    %19 = sbr.rel (0) target = $region21
  $region20: #{deepfake_forward.1} parent=0 // pred_region
    _
  $region21: #{deepfake_forward.1} parent=0 // pred_fallthru
    _
  %v21 = vld [vmem:[%s0] sm:$0xf]
  %v22 = vld [vmem:[%s0 + $0x4] sm:$0xf]
  %v23 = vld [vmem:[%s0 + $0x8] sm:$0xf]
  %v24 = vld [vmem:[%s0 + $0xc] sm:$0xf]
  %v25 = vld [vmem:[%s1] sm:$0xf]
  %v26 = vld [vmem:[%s1 + $0x4] sm:$0x3]
  %v27 = vld [vmem:[%s2] sm:$0x1]
  %v29 = vperm.slane %v27, 0
  %v35 = vunpack.c.l.b16 %v21
  %v36 = vunpack.c.l.b16 %v22
  %v37 = vunpack.c.l.b16 %v23
  %v38 = vunpack.c.l.b16 %v24
  %v39 = vpack.c.b16 %v36, %v35
  %v40 = vpack.c.b16 %v38, %v37
  %v43 = vunpack.c.l.b16 %v25
  %v44 = vunpack.c.l.b16 %v26
  %v45 = vpack.c.b16 %v44, %v43
  %vm46 = vcmask 97280
  %v48 = vsel %vm46, %v39, 0
  %v51 = vsel %vm46, %v40, 0
  %vm53 = vcmask 1045504
  %v55 = vsel %vm53, %v45, 0
  %57 = vmatpush.bf16.msra.mxu0 0
  %58 = vmatpush.bf16.msra.mxu0 0
  %59 = vmatpush.bf16.msra.mxu0 0
  %60 = vmatpush.bf16.msra.mxu0 0
  %61 = vmatpush.bf16.msra.mxu0 0
  %62 = vmatpush.bf16.msra.mxu0 0
  %63 = vmatpush.bf16.msra.mxu0 0
  %64 = vmatpush.bf16.msra.mxu0 %v55
  %65 = vmatmul.bf16.gmra.mxu0 %v48
  %v66 = vpop.f32.mrf.mxu0
  %v67 = vadd.f32 %v29, %v66
  %v68 = vpop.f32.mrf.mxu0
  %v69 = vadd.f32 %v29, %v68
  %70 = vmatmul.bf16.gmra.mxu0 %v51
  %v71 = vpop.f32.mrf.mxu0
  %v72 = vadd.f32 %v29, %v71
  %v73 = vpop.f32.mrf.mxu0
  %v74 = vadd.f32 %v29, %v73
  %75 = vdwg.mxu0
  %v76 = vmax.f32 %v67, 0.0
  %v77 = vmax.f32 %v69, 0.0
  %v78 = vmax.f32 %v72, 0.0
  %v79 = vmax.f32 %v74, 0.0
  %v80 = vpack.c.bf16 %v76, %v76
  %v81 = vpack.c.bf16 %v77, %v77
  %v82 = vpack.c.bf16 %v78, %v78
  %v83 = vpack.c.bf16 %v79, %v79
  %vm84 = vcmask 519168
  %85 = vst.msk [vmem:[#allocation2] sm:$0xf] %vm84, %v80
  %86 = vst.msk [vmem:[#allocation2 + $0x8] sm:$0xf] %vm84, %v81
  %87 = vst.msk [vmem:[#allocation2 + $0x10] sm:$0xf] %vm84, %v82
  %88 = vst.msk [vmem:[#allocation2 + $0x18] sm:$0xf] %vm84, %v83
  %v89 = vld [vmem:[#allocation2] sm:$0xf]
  %v90 = vld [vmem:[#allocation2 + $0x8] sm:$0xf]
  %v91 = vld [vmem:[#allocation2 + $0x10] sm:$0xf]
  %v92 = vld [vmem:[#allocation2 + $0x18] sm:$0xf]
  %v93 = vld [vmem:[%s3] sm:$0xf]
  %v94 = vld [vmem:[%s3 + $0x4] sm:$0xf]
  %v95 = vld [vmem:[%s3 + $0x8] sm:$0xf]
  %v96 = vld [vmem:[%s3 + $0xc] sm:$0xf]
  %v97 = vld [vmem:[%s3 + $0x10] sm:$0xf]
  %v98 = vld [vmem:[%s3 + $0x14] sm:$0xf]
  %v99 = vld [vmem:[%s3 + $0x18] sm:$0xf]
  %v100 = vld [vmem:[%s3 + $0x1c] sm:$0xf]
  %v101 = vld [vmem:[%s4] sm:$0x1]
  %v102 = vperm.slane %v101, 0
  %v107 = vunpack.c.l.b16 %v89
  %v108 = vunpack.c.l.b16 %v90
  %v109 = vunpack.c.l.b16 %v91
  %v110 = vunpack.c.l.b16 %v92
  %v111 = vpack.c.b16 %v108, %v107
  %v112 = vpack.c.b16 %v110, %v109
  %v121 = vunpack.c.l.b16 %v93
  %v122 = vunpack.c.l.b16 %v94
  %v123 = vunpack.c.l.b16 %v95
  %v124 = vunpack.c.l.b16 %v96
  %v125 = vunpack.c.l.b16 %v97
  %v126 = vunpack.c.l.b16 %v98
  %v127 = vunpack.c.l.b16 %v99
  %v128 = vunpack.c.l.b16 %v100
  %v129 = vpack.c.b16 %v122, %v121
  %v130 = vpack.c.b16 %v124, %v123
  %v131 = vpack.c.b16 %v126, %v125
  %v132 = vpack.c.b16 %v128, %v127
  %vm137 = vcmask 523264
  %v139 = vsel %vm137, %v111, 0
  %v142 = vsel %vm137, %v112, 0
  %144 = vmatpush.bf16.msra.mxu0 0
  %145 = vmatpush.bf16.msra.mxu0 0
  %146 = vmatpush.bf16.msra.mxu0 0
  %147 = vmatpush.bf16.msra.mxu0 0
  %148 = vmatpush.bf16.msra.mxu0 %v132
  %149 = vmatpush.bf16.msra.mxu0 %v131
  %150 = vmatpush.bf16.msra.mxu0 %v130
  %151 = vmatpush.bf16.msra.mxu0 %v129
  %152 = vmatmul.bf16.gmra.mxu0 %v139
  %v153 = vpop.f32.mrf.mxu0
  %v154 = vadd.f32 %v102, %v153
  %v155 = vpop.f32.mrf.mxu0
  %v156 = vadd.f32 %v102, %v155
  %157 = vmatmul.bf16.gmra.mxu0 %v142
  %v158 = vpop.f32.mrf.mxu0
  %v159 = vadd.f32 %v102, %v158
  %v160 = vpop.f32.mrf.mxu0
  %v161 = vadd.f32 %v102, %v160
  %162 = vdwg.mxu0
  %v163 = vmax.f32 %v154, 0.0
  %v164 = vmax.f32 %v156, 0.0
  %v165 = vmax.f32 %v159, 0.0
  %v166 = vmax.f32 %v161, 0.0
  %v167 = vpack.c.bf16 %v163, %v163
  %v168 = vpack.c.bf16 %v164, %v164
  %v169 = vpack.c.bf16 %v165, %v165
  %v170 = vpack.c.bf16 %v166, %v166
  %175 = vrot.lane.b32.xlu0 %v167, 64
  %v176 = vpop.permute.xlu0 %175
  %177 = vrot.lane.b32.xlu0 %v168, 64
  %v178 = vpop.permute.xlu0 %177
  %179 = vrot.lane.b32.xlu0 %v169, 64
  %v180 = vpop.permute.xlu0 %179
  %181 = vrot.lane.b32.xlu0 %v170, 64
  %v182 = vpop.permute.xlu0 %181
  %vm187 = vcmask 1043968
  %188 = vst.msk [vmem:[#allocation2] sm:$0xf] %vm187, %v176
  %189 = vst.msk [vmem:[#allocation2 + $0x8] sm:$0xf] %vm187, %v178
  %190 = vst.msk [vmem:[#allocation2 + $0x10] sm:$0xf] %vm187, %v180
  %191 = vst.msk [vmem:[#allocation2 + $0x18] sm:$0xf] %vm187, %v182
  %v192 = vld [vmem:[#allocation2] sm:$0xf]
  %v193 = vld [vmem:[#allocation2 + $0x8] sm:$0xf]
  %v194 = vld [vmem:[#allocation2 + $0x10] sm:$0xf]
  %v195 = vld [vmem:[#allocation2 + $0x18] sm:$0xf]
  %v196 = vld [vmem:[%s3 + $0x20] sm:$0xf]
  %v197 = vld [vmem:[%s3 + $0x24] sm:$0xf]
  %v198 = vld [vmem:[%s3 + $0x28] sm:$0xf]
  %v199 = vld [vmem:[%s3 + $0x2c] sm:$0xf]
  %v200 = vld [vmem:[%s3 + $0x30] sm:$0xf]
  %v201 = vld [vmem:[%s3 + $0x34] sm:$0xf]
  %v202 = vld [vmem:[%s3 + $0x38] sm:$0xf]
  %v203 = vld [vmem:[%s3 + $0x3c] sm:$0xf]
  %v204 = vld [vmem:[%s3 + $0x40] sm:$0xf]
  %v205 = vld [vmem:[%s3 + $0x44] sm:$0xf]
  %v206 = vld [vmem:[%s3 + $0x48] sm:$0xf]
  %v207 = vld [vmem:[%s3 + $0x4c] sm:$0xf]
  %v208 = vld [vmem:[%s3 + $0x50] sm:$0xf]
  %v209 = vld [vmem:[%s3 + $0x54] sm:$0xf]
  %v210 = vld [vmem:[%s3 + $0x58] sm:$0xf]
  %v211 = vld [vmem:[%s3 + $0x5c] sm:$0xf]
  %v212 = vld [vmem:[%s4 + $0x1] sm:$0x1]
  %v213 = vperm.slane %v212, 0
  %v218 = vunpack.c.l.b16 %v192
  %v219 = vunpack.c.l.b16 %v193
  %v220 = vunpack.c.l.b16 %v194
  %v221 = vunpack.c.l.b16 %v195
  %v222 = vpack.c.b16 %v219, %v218
  %v223 = vpack.c.b16 %v221, %v220
  %v242 = vunpack.c.l.b16 %v196
  %v243 = vunpack.c.l.b16 %v197
  %v244 = vunpack.c.l.b16 %v198
  %v245 = vunpack.c.l.b16 %v199
  %v246 = vunpack.c.l.b16 %v200
  %v247 = vunpack.c.l.b16 %v201
  %v248 = vunpack.c.l.b16 %v202
  %v249 = vunpack.c.l.b16 %v203
  %v250 = vunpack.c.l.b16 %v204
  %v251 = vunpack.c.l.b16 %v205
  %v252 = vunpack.c.l.b16 %v206
  %v253 = vunpack.c.l.b16 %v207
  %v254 = vunpack.c.l.b16 %v208
  %v255 = vunpack.c.l.b16 %v209
  %v256 = vunpack.c.l.b16 %v210
  %v257 = vunpack.c.l.b16 %v211
  %v258 = vpack.c.b16 %v243, %v242
  %v259 = vpack.c.b16 %v245, %v244
  %v260 = vpack.c.b16 %v247, %v246
  %v261 = vpack.c.b16 %v249, %v248
  %v262 = vpack.c.b16 %v251, %v250
  %v263 = vpack.c.b16 %v253, %v252
  %v264 = vpack.c.b16 %v255, %v254
  %v265 = vpack.c.b16 %v257, %v256
  %274 = vmatpush.bf16.msra.mxu0 %v265
  %275 = vmatpush.bf16.msra.mxu0 %v264
  %276 = vmatpush.bf16.msra.mxu0 %v263
  %277 = vmatpush.bf16.msra.mxu0 %v262
  %278 = vmatpush.bf16.msra.mxu0 %v261
  %279 = vmatpush.bf16.msra.mxu0 %v260
  %280 = vmatpush.bf16.msra.mxu0 %v259
  %281 = vmatpush.bf16.msra.mxu0 %v258
  %282 = vmatmul.bf16.gmra.mxu0 %v222
  %v283 = vpop.f32.mrf.mxu0
  %v284 = vadd.f32 %v213, %v283
  %v285 = vpop.f32.mrf.mxu0
  %v286 = vadd.f32 %v213, %v285
  %287 = vmatmul.bf16.gmra.mxu0 %v223
  %v288 = vpop.f32.mrf.mxu0
  %v289 = vadd.f32 %v213, %v288
  %v290 = vpop.f32.mrf.mxu0
  %v291 = vadd.f32 %v213, %v290
  %292 = vdwg.mxu0
  %v293 = vmax.f32 %v284, 0.0
  %v294 = vmax.f32 %v286, 0.0
  %v295 = vmax.f32 %v289, 0.0
  %v296 = vmax.f32 %v291, 0.0
  %v297 = vpack.c.bf16 %v293, %v293
  %v298 = vpack.c.bf16 %v294, %v294
  %v299 = vpack.c.bf16 %v295, %v295
  %v300 = vpack.c.bf16 %v296, %v296
  %301 = vst.msk [vmem:[#allocation2 + $0x4] sm:$0xf] %vm84, %v297
  %302 = vst.msk [vmem:[#allocation2 + $0xc] sm:$0xf] %vm84, %v298
  %303 = vst.msk [vmem:[#allocation2 + $0x14] sm:$0xf] %vm84, %v299
  %304 = vst.msk [vmem:[#allocation2 + $0x1c] sm:$0xf] %vm84, %v300
  %v305 = vld [vmem:[#allocation2] sm:$0xff]
  %v306 = vld [vmem:[#allocation2 + $0x8] sm:$0xff]
  %v307 = vld [vmem:[#allocation2 + $0x10] sm:$0xff]
  %v308 = vld [vmem:[#allocation2 + $0x18] sm:$0xff]
  %v309 = vld [vmem:[%s3 + $0x60] sm:$0xf]
  %v310 = vld [vmem:[%s3 + $0x64] sm:$0xf]
  %v311 = vld [vmem:[%s3 + $0x68] sm:$0xf]
  %v312 = vld [vmem:[%s3 + $0x6c] sm:$0xf]
  %v313 = vld [vmem:[%s3 + $0x70] sm:$0xf]
  %v314 = vld [vmem:[%s3 + $0x74] sm:$0xf]
  %v315 = vld [vmem:[%s3 + $0x78] sm:$0xf]
  %v316 = vld [vmem:[%s3 + $0x7c] sm:$0xf]
  %v317 = vld [vmem:[%s3 + $0x80] sm:$0xf]
  %v318 = vld [vmem:[%s3 + $0x84] sm:$0xf]
  %v319 = vld [vmem:[%s3 + $0x88] sm:$0xf]
  %v320 = vld [vmem:[%s3 + $0x8c] sm:$0xf]
  %v321 = vld [vmem:[%s3 + $0x90] sm:$0xf]
  %v322 = vld [vmem:[%s3 + $0x94] sm:$0xf]
  %v323 = vld [vmem:[%s3 + $0x98] sm:$0xf]
  %v324 = vld [vmem:[%s3 + $0x9c] sm:$0xf]
  %v325 = vld [vmem:[%s3 + $0xa0] sm:$0xf]
  %v326 = vld [vmem:[%s3 + $0xa4] sm:$0xf]
  %v327 = vld [vmem:[%s3 + $0xa8] sm:$0xf]
  %v328 = vld [vmem:[%s3 + $0xac] sm:$0xf]
  %v329 = vld [vmem:[%s3 + $0xb0] sm:$0xf]
  %v330 = vld [vmem:[%s3 + $0xb4] sm:$0xf]
  %v331 = vld [vmem:[%s3 + $0xb8] sm:$0xf]
  %v332 = vld [vmem:[%s3 + $0xbc] sm:$0xf]
  %v333 = vld [vmem:[%s4 + $0x2] sm:$0x1]
  %v334 = vperm.slane %v333, 0
  %v339 = vunpack.c.l.b16 %v305
  %v340 = vunpack.c.h.b16 %v305
  %v341 = vunpack.c.l.b16 %v306
  %v342 = vunpack.c.h.b16 %v306
  %v343 = vunpack.c.l.b16 %v307
  %v344 = vunpack.c.h.b16 %v307
  %v345 = vunpack.c.l.b16 %v308
  %v346 = vunpack.c.h.b16 %v308
  %v347 = vpack.c.b16 %v341, %v339
  %v348 = vpack.c.b16 %v342, %v340
  %v349 = vpack.c.b16 %v345, %v343
  %v350 = vpack.c.b16 %v346, %v344
  %v377 = vunpack.c.l.b16 %v309
  %v378 = vunpack.c.l.b16 %v310
  %v379 = vunpack.c.l.b16 %v311
  %v380 = vunpack.c.l.b16 %v312
  %v381 = vunpack.c.l.b16 %v313
  %v382 = vunpack.c.l.b16 %v314
  %v383 = vunpack.c.l.b16 %v315
  %v384 = vunpack.c.l.b16 %v316
  %v385 = vunpack.c.l.b16 %v317
  %v386 = vunpack.c.l.b16 %v318
  %v387 = vunpack.c.l.b16 %v319
  %v388 = vunpack.c.l.b16 %v320
  %v389 = vunpack.c.l.b16 %v321
  %v390 = vunpack.c.l.b16 %v322
  %v391 = vunpack.c.l.b16 %v323
  %v392 = vunpack.c.l.b16 %v324
  %v393 = vunpack.c.l.b16 %v325
  %v394 = vunpack.c.l.b16 %v326
  %v395 = vunpack.c.l.b16 %v327
  %v396 = vunpack.c.l.b16 %v328
  %v397 = vunpack.c.l.b16 %v329
  %v398 = vunpack.c.l.b16 %v330
  %v399 = vunpack.c.l.b16 %v331
  %v400 = vunpack.c.l.b16 %v332
  %v401 = vpack.c.b16 %v378, %v377
  %v402 = vpack.c.b16 %v380, %v379
  %v403 = vpack.c.b16 %v382, %v381
  %v404 = vpack.c.b16 %v384, %v383
  %v405 = vpack.c.b16 %v386, %v385
  %v406 = vpack.c.b16 %v388, %v387
  %v407 = vpack.c.b16 %v390, %v389
  %v408 = vpack.c.b16 %v392, %v391
  %v409 = vpack.c.b16 %v394, %v393
  %v410 = vpack.c.b16 %v396, %v395
  %v411 = vpack.c.b16 %v398, %v397
  %v412 = vpack.c.b16 %v400, %v399
  %v426 = vsel %vm137, %v348, 0
  %v429 = vsel %vm137, %v350, 0
  %431 = vmatpush.bf16.msra.mxu0 %v408
  %432 = vmatpush.bf16.msra.mxu0 %v407
  %433 = vmatpush.bf16.msra.mxu0 %v406
  %434 = vmatpush.bf16.msra.mxu0 %v405
  %435 = vmatpush.bf16.msra.mxu0 %v404
  %436 = vmatpush.bf16.msra.mxu0 %v403
  %437 = vmatpush.bf16.msra.mxu0 %v402
  %438 = vmatpush.bf16.msra.mxu0 %v401
  %439 = vmatmul.bf16.gmra.mxu0 %v347
  %v440 = vpop.f32.mrf.mxu0
  %v441 = vadd.f32 %v334, %v440
  %v442 = vpop.f32.mrf.mxu0
  %v443 = vadd.f32 %v334, %v442
  %444 = vmatmul.bf16.gmra.mxu0 %v349
  %v445 = vpop.f32.mrf.mxu0
  %v446 = vadd.f32 %v334, %v445
  %v447 = vpop.f32.mrf.mxu0
  %v448 = vadd.f32 %v334, %v447
  %449 = vdwg.mxu0
  %450 = vmatpush.bf16.msra.mxu0 0
  %451 = vmatpush.bf16.msra.mxu0 0
  %452 = vmatpush.bf16.msra.mxu0 0
  %453 = vmatpush.bf16.msra.mxu0 0
  %454 = vmatpush.bf16.msra.mxu0 %v412
  %455 = vmatpush.bf16.msra.mxu0 %v411
  %456 = vmatpush.bf16.msra.mxu0 %v410
  %457 = vmatpush.bf16.msra.mxu0 %v409
  %458 = vmatmul.bf16.gmra.mxu0 %v426
  %v459 = vpop.f32.mrf.mxu0
  %v460 = vadd.f32 %v441, %v459
  %v461 = vpop.f32.mrf.mxu0
  %v462 = vadd.f32 %v443, %v461
  %463 = vmatmul.bf16.gmra.mxu0 %v429
  %v464 = vpop.f32.mrf.mxu0
  %v465 = vadd.f32 %v446, %v464
  %v466 = vpop.f32.mrf.mxu0
  %v467 = vadd.f32 %v448, %v466
  %468 = vdwg.mxu0
  %v469 = vmax.f32 %v460, 0.0
  %v470 = vmax.f32 %v462, 0.0
  %v471 = vmax.f32 %v465, 0.0
  %v472 = vmax.f32 %v467, 0.0
  %v473 = vpack.c.bf16 %v469, %v469
  %v474 = vpack.c.bf16 %v470, %v470
  %v475 = vpack.c.bf16 %v471, %v471
  %v476 = vpack.c.bf16 %v472, %v472
  %481 = vrot.lane.b32.xlu0 %v473, 64
  %v482 = vpop.permute.xlu0 %481
  %483 = vrot.lane.b32.xlu0 %v474, 64
  %v484 = vpop.permute.xlu0 %483
  %485 = vrot.lane.b32.xlu0 %v475, 64
  %v486 = vpop.permute.xlu0 %485
  %487 = vrot.lane.b32.xlu0 %v476, 64
  %v488 = vpop.permute.xlu0 %487
  %493 = vst.msk [vmem:[#allocation2 + $0x4] sm:$0xf] %vm187, %v482
  %494 = vst.msk [vmem:[#allocation2 + $0xc] sm:$0xf] %vm187, %v484
  %495 = vst.msk [vmem:[#allocation2 + $0x14] sm:$0xf] %vm187, %v486
  %496 = vst.msk [vmem:[#allocation2 + $0x1c] sm:$0xf] %vm187, %v488
  %v497 = vld [vmem:[#allocation2] sm:$0xff]
  %v498 = vld [vmem:[#allocation2 + $0x8] sm:$0xff]
  %v499 = vld [vmem:[#allocation2 + $0x10] sm:$0xff]
  %v500 = vld [vmem:[#allocation2 + $0x18] sm:$0xff]
  %v501 = vld [vmem:[%s3 + $0xc0] sm:$0xf]
  %v502 = vld [vmem:[%s3 + $0xc4] sm:$0xf]
  %v503 = vld [vmem:[%s3 + $0xc8] sm:$0xf]
  %v504 = vld [vmem:[%s3 + $0xcc] sm:$0xf]
  %v505 = vld [vmem:[%s3 + $0xd0] sm:$0xf]
  %v506 = vld [vmem:[%s3 + $0xd4] sm:$0xf]
  %v507 = vld [vmem:[%s3 + $0xd8] sm:$0xf]
  %v508 = vld [vmem:[%s3 + $0xdc] sm:$0xf]
  %v509 = vld [vmem:[%s3 + $0xe0] sm:$0xf]
  %v510 = vld [vmem:[%s3 + $0xe4] sm:$0xf]
  %v511 = vld [vmem:[%s3 + $0xe8] sm:$0xf]
  %v512 = vld [vmem:[%s3 + $0xec] sm:$0xf]
  %v513 = vld [vmem:[%s3 + $0xf0] sm:$0xf]
  %v514 = vld [vmem:[%s3 + $0xf4] sm:$0xf]
  %v515 = vld [vmem:[%s3 + $0xf8] sm:$0xf]
  %v516 = vld [vmem:[%s3 + $0xfc] sm:$0xf]
  %v517 = vld [vmem:[%s3 + $0x100] sm:$0xf]
  %v518 = vld [vmem:[%s3 + $0x104] sm:$0xf]
  %v519 = vld [vmem:[%s3 + $0x108] sm:$0xf]
  %v520 = vld [vmem:[%s3 + $0x10c] sm:$0xf]
  %v521 = vld [vmem:[%s3 + $0x110] sm:$0xf]
  %v522 = vld [vmem:[%s3 + $0x114] sm:$0xf]
  %v523 = vld [vmem:[%s3 + $0x118] sm:$0xf]
  %v524 = vld [vmem:[%s3 + $0x11c] sm:$0xf]
  %v525 = vld [vmem:[%s3 + $0x120] sm:$0xf]
  %v526 = vld [vmem:[%s3 + $0x124] sm:$0xf]
  %v527 = vld [vmem:[%s3 + $0x128] sm:$0xf]
  %v528 = vld [vmem:[%s3 + $0x12c] sm:$0xf]
  %v529 = vld [vmem:[%s3 + $0x130] sm:$0xf]
  %v530 = vld [vmem:[%s3 + $0x134] sm:$0xf]
  %v531 = vld [vmem:[%s3 + $0x138] sm:$0xf]
  %v532 = vld [vmem:[%s3 + $0x13c] sm:$0xf]
  %v533 = vld [vmem:[%s4 + $0x3] sm:$0x1]
  %v534 = vperm.slane %v533, 0
  %v539 = vunpack.c.l.b16 %v497
  %v540 = vunpack.c.h.b16 %v497
  %v541 = vunpack.c.l.b16 %v498
  %v542 = vunpack.c.h.b16 %v498
  %v543 = vunpack.c.l.b16 %v499
  %v544 = vunpack.c.h.b16 %v499
  %v545 = vunpack.c.l.b16 %v500
  %v546 = vunpack.c.h.b16 %v500
  %v547 = vpack.c.b16 %v541, %v539
  %v548 = vpack.c.b16 %v542, %v540
  %v549 = vpack.c.b16 %v545, %v543
  %v550 = vpack.c.b16 %v546, %v544
  %v587 = vunpack.c.l.b16 %v501
  %v588 = vunpack.c.l.b16 %v502
  %v589 = vunpack.c.l.b16 %v503
  %v590 = vunpack.c.l.b16 %v504
  %v591 = vunpack.c.l.b16 %v505
  %v592 = vunpack.c.l.b16 %v506
  %v593 = vunpack.c.l.b16 %v507
  %v594 = vunpack.c.l.b16 %v508
  %v595 = vunpack.c.l.b16 %v509
  %v596 = vunpack.c.l.b16 %v510
  %v597 = vunpack.c.l.b16 %v511
  %v598 = vunpack.c.l.b16 %v512
  %v599 = vunpack.c.l.b16 %v513
  %v600 = vunpack.c.l.b16 %v514
  %v601 = vunpack.c.l.b16 %v515
  %v602 = vunpack.c.l.b16 %v516
  %v603 = vunpack.c.l.b16 %v517
  %v604 = vunpack.c.l.b16 %v518
  %v605 = vunpack.c.l.b16 %v519
  %v606 = vunpack.c.l.b16 %v520
  %v607 = vunpack.c.l.b16 %v521
  %v608 = vunpack.c.l.b16 %v522
  %v609 = vunpack.c.l.b16 %v523
  %v610 = vunpack.c.l.b16 %v524
  %v611 = vunpack.c.l.b16 %v525
  %v612 = vunpack.c.l.b16 %v526
  %v613 = vunpack.c.l.b16 %v527
  %v614 = vunpack.c.l.b16 %v528
  %v615 = vunpack.c.l.b16 %v529
  %v616 = vunpack.c.l.b16 %v530
  %v617 = vunpack.c.l.b16 %v531
  %v618 = vunpack.c.l.b16 %v532
  %v619 = vpack.c.b16 %v588, %v587
  %v620 = vpack.c.b16 %v590, %v589
  %v621 = vpack.c.b16 %v592, %v591
  %v622 = vpack.c.b16 %v594, %v593
  %v623 = vpack.c.b16 %v596, %v595
  %v624 = vpack.c.b16 %v598, %v597
  %v625 = vpack.c.b16 %v600, %v599
  %v626 = vpack.c.b16 %v602, %v601
  %v627 = vpack.c.b16 %v604, %v603
  %v628 = vpack.c.b16 %v606, %v605
  %v629 = vpack.c.b16 %v608, %v607
  %v630 = vpack.c.b16 %v610, %v609
  %v631 = vpack.c.b16 %v612, %v611
  %v632 = vpack.c.b16 %v614, %v613
  %v633 = vpack.c.b16 %v616, %v615
  %v634 = vpack.c.b16 %v618, %v617
  %651 = vmatpush.bf16.msra.mxu0 %v626
  %652 = vmatpush.bf16.msra.mxu0 %v625
  %653 = vmatpush.bf16.msra.mxu0 %v624
  %654 = vmatpush.bf16.msra.mxu0 %v623
  %655 = vmatpush.bf16.msra.mxu0 %v622
  %656 = vmatpush.bf16.msra.mxu0 %v621
  %657 = vmatpush.bf16.msra.mxu0 %v620
  %658 = vmatpush.bf16.msra.mxu0 %v619
  %659 = vmatmul.bf16.gmra.mxu0 %v547
  %v660 = vpop.f32.mrf.mxu0
  %v661 = vadd.f32 %v534, %v660
  %v662 = vpop.f32.mrf.mxu0
  %v663 = vadd.f32 %v534, %v662
  %664 = vmatmul.bf16.gmra.mxu0 %v549
  %v665 = vpop.f32.mrf.mxu0
  %v666 = vadd.f32 %v534, %v665
  %v667 = vpop.f32.mrf.mxu0
  %v668 = vadd.f32 %v534, %v667
  %669 = vdwg.mxu0
  %670 = vmatpush.bf16.msra.mxu0 %v634
  %671 = vmatpush.bf16.msra.mxu0 %v633
  %672 = vmatpush.bf16.msra.mxu0 %v632
  %673 = vmatpush.bf16.msra.mxu0 %v631
  %674 = vmatpush.bf16.msra.mxu0 %v630
  %675 = vmatpush.bf16.msra.mxu0 %v629
  %676 = vmatpush.bf16.msra.mxu0 %v628
  %677 = vmatpush.bf16.msra.mxu0 %v627
  %678 = vmatmul.bf16.gmra.mxu0 %v548
  %v679 = vpop.f32.mrf.mxu0
  %v680 = vadd.f32 %v661, %v679
  %v681 = vpop.f32.mrf.mxu0
  %v682 = vadd.f32 %v663, %v681
  %683 = vmatmul.bf16.gmra.mxu0 %v550
  %v684 = vpop.f32.mrf.mxu0
  %v685 = vadd.f32 %v666, %v684
  %v686 = vpop.f32.mrf.mxu0
  %v687 = vadd.f32 %v668, %v686
  %688 = vdwg.mxu0
  %v689 = vmax.f32 %v680, 0.0
  %v690 = vmax.f32 %v682, 0.0
  %v691 = vmax.f32 %v685, 0.0
  %v692 = vmax.f32 %v687, 0.0
  %v693 = vpack.c.bf16 %v689, %v689
  %v694 = vpack.c.bf16 %v690, %v690
  %v695 = vpack.c.bf16 %v691, %v691
  %v696 = vpack.c.bf16 %v692, %v692
  %697 = vst.msk [vmem:[#allocation2] sm:$0xf] %vm84, %v693
  %698 = vst.msk [vmem:[#allocation2 + $0x8] sm:$0xf] %vm84, %v694
  %699 = vst.msk [vmem:[#allocation2 + $0x10] sm:$0xf] %vm84, %v695
  %700 = vst.msk [vmem:[#allocation2 + $0x18] sm:$0xf] %vm84, %v696
  %v701 = vld [vmem:[#allocation2] sm:$0xf]
  %v702 = vld [vmem:[#allocation2 + $0x8] sm:$0xf]
  %v703 = vld [vmem:[#allocation2 + $0x10] sm:$0xf]
  %v704 = vld [vmem:[#allocation2 + $0x18] sm:$0xf]
  %v705 = vld [vmem:[%s3 + $0x140] sm:$0xf]
  %v706 = vld [vmem:[%s3 + $0x144] sm:$0xf]
  %v707 = vld [vmem:[%s3 + $0x148] sm:$0xf]
  %v708 = vld [vmem:[%s3 + $0x14c] sm:$0xf]
  %v709 = vld [vmem:[%s3 + $0x150] sm:$0xf]
  %v710 = vld [vmem:[%s3 + $0x154] sm:$0xf]
  %v711 = vld [vmem:[%s3 + $0x158] sm:$0xf]
  %v712 = vld [vmem:[%s3 + $0x15c] sm:$0xf]
  %v713 = vld [vmem:[%s4 + $0x4] sm:$0x1]
  %v714 = vperm.slane %v713, 0
  %v719 = vunpack.c.l.b16 %v701
  %v720 = vunpack.c.l.b16 %v702
  %v721 = vunpack.c.l.b16 %v703
  %v722 = vunpack.c.l.b16 %v704
  %v723 = vpack.c.b16 %v720, %v719
  %v724 = vpack.c.b16 %v722, %v721
  %v733 = vunpack.c.l.b16 %v705
  %v734 = vunpack.c.l.b16 %v706
  %v735 = vunpack.c.l.b16 %v707
  %v736 = vunpack.c.l.b16 %v708
  %v737 = vunpack.c.l.b16 %v709
  %v738 = vunpack.c.l.b16 %v710
  %v739 = vunpack.c.l.b16 %v711
  %v740 = vunpack.c.l.b16 %v712
  %v741 = vpack.c.b16 %v734, %v733
  %v742 = vpack.c.b16 %v736, %v735
  %v743 = vpack.c.b16 %v738, %v737
  %v744 = vpack.c.b16 %v740, %v739
  %v750 = vsel %vm137, %v723, 0
  %v753 = vsel %vm137, %v724, 0
  %755 = vmatpush.bf16.msra.mxu0 0
  %756 = vmatpush.bf16.msra.mxu0 0
  %757 = vmatpush.bf16.msra.mxu0 0
  %758 = vmatpush.bf16.msra.mxu0 0
  %759 = vmatpush.bf16.msra.mxu0 %v744
  %760 = vmatpush.bf16.msra.mxu0 %v743
  %761 = vmatpush.bf16.msra.mxu0 %v742
  %762 = vmatpush.bf16.msra.mxu0 %v741
  %763 = vmatmul.bf16.gmra.mxu0 %v750
  %v764 = vpop.f32.mrf.mxu0
  %v765 = vadd.f32 %v714, %v764
  %v766 = vpop.f32.mrf.mxu0
  %v767 = vadd.f32 %v714, %v766
  %768 = vmatmul.bf16.gmra.mxu0 %v753
  %v769 = vpop.f32.mrf.mxu0
  %v770 = vadd.f32 %v714, %v769
  %v771 = vpop.f32.mrf.mxu0
  %v772 = vadd.f32 %v714, %v771
  %773 = vdwg.mxu0
  %v774 = vmax.f32 %v765, 0.0
  %v775 = vmax.f32 %v767, 0.0
  %v776 = vmax.f32 %v770, 0.0
  %v777 = vmax.f32 %v772, 0.0
  %v778 = vpack.c.bf16 %v774, %v774
  %v779 = vpack.c.bf16 %v775, %v775
  %v780 = vpack.c.bf16 %v776, %v776
  %v781 = vpack.c.bf16 %v777, %v777
  %786 = vrot.lane.b32.xlu0 %v778, 64
  %v787 = vpop.permute.xlu0 %786
  %788 = vrot.lane.b32.xlu0 %v779, 64
  %v789 = vpop.permute.xlu0 %788
  %790 = vrot.lane.b32.xlu0 %v780, 64
  %v791 = vpop.permute.xlu0 %790
  %792 = vrot.lane.b32.xlu0 %v781, 64
  %v793 = vpop.permute.xlu0 %792
  %798 = vst.msk [vmem:[#allocation2] sm:$0xf] %vm187, %v787
  %799 = vst.msk [vmem:[#allocation2 + $0x8] sm:$0xf] %vm187, %v789
  %800 = vst.msk [vmem:[#allocation2 + $0x10] sm:$0xf] %vm187, %v791
  %801 = vst.msk [vmem:[#allocation2 + $0x18] sm:$0xf] %vm187, %v793
  %v802 = vld [vmem:[#allocation2] sm:$0xf]
  %v803 = vld [vmem:[#allocation2 + $0x8] sm:$0xf]
  %v804 = vld [vmem:[#allocation2 + $0x10] sm:$0xf]
  %v805 = vld [vmem:[#allocation2 + $0x18] sm:$0xf]
  %v806 = vld [vmem:[%s3 + $0x160] sm:$0xf]
  %v807 = vld [vmem:[%s3 + $0x164] sm:$0xf]
  %v808 = vld [vmem:[%s3 + $0x168] sm:$0xf]
  %v809 = vld [vmem:[%s3 + $0x16c] sm:$0xf]
  %v810 = vld [vmem:[%s3 + $0x170] sm:$0xf]
  %v811 = vld [vmem:[%s3 + $0x174] sm:$0xf]
  %v812 = vld [vmem:[%s3 + $0x178] sm:$0xf]
  %v813 = vld [vmem:[%s3 + $0x17c] sm:$0xf]
  %v814 = vld [vmem:[%s3 + $0x180] sm:$0xf]
  %v815 = vld [vmem:[%s3 + $0x184] sm:$0xf]
  %v816 = vld [vmem:[%s3 + $0x188] sm:$0xf]
  %v817 = vld [vmem:[%s3 + $0x18c] sm:$0xf]
  %v818 = vld [vmem:[%s3 + $0x190] sm:$0xf]
  %v819 = vld [vmem:[%s3 + $0x194] sm:$0xf]
  %v820 = vld [vmem:[%s3 + $0x198] sm:$0xf]
  %v821 = vld [vmem:[%s3 + $0x19c] sm:$0xf]
  %v822 = vld [vmem:[%s4 + $0x5] sm:$0x1]
  %v823 = vperm.slane %v822, 0
  %v828 = vunpack.c.l.b16 %v802
  %v829 = vunpack.c.l.b16 %v803
  %v830 = vunpack.c.l.b16 %v804
  %v831 = vunpack.c.l.b16 %v805
  %v832 = vpack.c.b16 %v829, %v828
  %v833 = vpack.c.b16 %v831, %v830
  %v852 = vunpack.c.l.b16 %v806
  %v853 = vunpack.c.l.b16 %v807
  %v854 = vunpack.c.l.b16 %v808
  %v855 = vunpack.c.l.b16 %v809
  %v856 = vunpack.c.l.b16 %v810
  %v857 = vunpack.c.l.b16 %v811
  %v858 = vunpack.c.l.b16 %v812
  %v859 = vunpack.c.l.b16 %v813
  %v860 = vunpack.c.l.b16 %v814
  %v861 = vunpack.c.l.b16 %v815
  %v862 = vunpack.c.l.b16 %v816
  %v863 = vunpack.c.l.b16 %v817
  %v864 = vunpack.c.l.b16 %v818
  %v865 = vunpack.c.l.b16 %v819
  %v866 = vunpack.c.l.b16 %v820
  %v867 = vunpack.c.l.b16 %v821
  %v868 = vpack.c.b16 %v853, %v852
  %v869 = vpack.c.b16 %v855, %v854
  %v870 = vpack.c.b16 %v857, %v856
  %v871 = vpack.c.b16 %v859, %v858
  %v872 = vpack.c.b16 %v861, %v860
  %v873 = vpack.c.b16 %v863, %v862
  %v874 = vpack.c.b16 %v865, %v864
  %v875 = vpack.c.b16 %v867, %v866
  %884 = vmatpush.bf16.msra.mxu0 %v875
  %885 = vmatpush.bf16.msra.mxu0 %v874
  %886 = vmatpush.bf16.msra.mxu0 %v873
  %887 = vmatpush.bf16.msra.mxu0 %v872
  %888 = vmatpush.bf16.msra.mxu0 %v871
  %889 = vmatpush.bf16.msra.mxu0 %v870
  %890 = vmatpush.bf16.msra.mxu0 %v869
  %891 = vmatpush.bf16.msra.mxu0 %v868
  %892 = vmatmul.bf16.gmra.mxu0 %v832
  %v893 = vpop.f32.mrf.mxu0
  %v894 = vadd.f32 %v823, %v893
  %v895 = vpop.f32.mrf.mxu0
  %v896 = vadd.f32 %v823, %v895
  %897 = vmatmul.bf16.gmra.mxu0 %v833
  %v898 = vpop.f32.mrf.mxu0
  %v899 = vadd.f32 %v823, %v898
  %v900 = vpop.f32.mrf.mxu0
  %v901 = vadd.f32 %v823, %v900
  %902 = vdwg.mxu0
  %v903 = vmax.f32 %v894, 0.0
  %v904 = vmax.f32 %v896, 0.0
  %v905 = vmax.f32 %v899, 0.0
  %v906 = vmax.f32 %v901, 0.0
  %v907 = vpack.c.bf16 %v903, %v903
  %v908 = vpack.c.bf16 %v904, %v904
  %v909 = vpack.c.bf16 %v905, %v905
  %v910 = vpack.c.bf16 %v906, %v906
  %911 = vst.msk [vmem:[#allocation2 + $0x4] sm:$0xf] %vm84, %v907
  %912 = vst.msk [vmem:[#allocation2 + $0xc] sm:$0xf] %vm84, %v908
  %913 = vst.msk [vmem:[#allocation2 + $0x14] sm:$0xf] %vm84, %v909
  %914 = vst.msk [vmem:[#allocation2 + $0x1c] sm:$0xf] %vm84, %v910
  %v915 = vld [vmem:[#allocation2] sm:$0xff]
  %v916 = vld [vmem:[#allocation2 + $0x8] sm:$0xff]
  %v917 = vld [vmem:[#allocation2 + $0x10] sm:$0xff]
  %v918 = vld [vmem:[#allocation2 + $0x18] sm:$0xff]
  %v919 = vld [vmem:[%s3 + $0x1a0] sm:$0xf]
  %v920 = vld [vmem:[%s3 + $0x1a4] sm:$0xf]
  %v921 = vld [vmem:[%s3 + $0x1a8] sm:$0xf]
  %v922 = vld [vmem:[%s3 + $0x1ac] sm:$0xf]
  %v923 = vld [vmem:[%s3 + $0x1b0] sm:$0xf]
  %v924 = vld [vmem:[%s3 + $0x1b4] sm:$0xf]
  %v925 = vld [vmem:[%s3 + $0x1b8] sm:$0xf]
  %v926 = vld [vmem:[%s3 + $0x1bc] sm:$0xf]
  %v927 = vld [vmem:[%s3 + $0x1c0] sm:$0xf]
  %v928 = vld [vmem:[%s3 + $0x1c4] sm:$0xf]
  %v929 = vld [vmem:[%s3 + $0x1c8] sm:$0xf]
  %v930 = vld [vmem:[%s3 + $0x1cc] sm:$0xf]
  %v931 = vld [vmem:[%s3 + $0x1d0] sm:$0xf]
  %v932 = vld [vmem:[%s3 + $0x1d4] sm:$0xf]
  %v933 = vld [vmem:[%s3 + $0x1d8] sm:$0xf]
  %v934 = vld [vmem:[%s3 + $0x1dc] sm:$0xf]
  %v935 = vld [vmem:[%s3 + $0x1e0] sm:$0xf]
  %v936 = vld [vmem:[%s3 + $0x1e4] sm:$0xf]
  %v937 = vld [vmem:[%s3 + $0x1e8] sm:$0xf]
  %v938 = vld [vmem:[%s3 + $0x1ec] sm:$0xf]
  %v939 = vld [vmem:[%s3 + $0x1f0] sm:$0xf]
  %v940 = vld [vmem:[%s3 + $0x1f4] sm:$0xf]
  %v941 = vld [vmem:[%s3 + $0x1f8] sm:$0xf]
  %v942 = vld [vmem:[%s3 + $0x1fc] sm:$0xf]
  %v943 = vld [vmem:[%s4 + $0x6] sm:$0x1]
  %v944 = vperm.slane %v943, 0
  %v949 = vunpack.c.l.b16 %v915
  %v950 = vunpack.c.h.b16 %v915
  %v951 = vunpack.c.l.b16 %v916
  %v952 = vunpack.c.h.b16 %v916
  %v953 = vunpack.c.l.b16 %v917
  %v954 = vunpack.c.h.b16 %v917
  %v955 = vunpack.c.l.b16 %v918
  %v956 = vunpack.c.h.b16 %v918
  %v957 = vpack.c.b16 %v951, %v949
  %v958 = vpack.c.b16 %v952, %v950
  %v959 = vpack.c.b16 %v955, %v953
  %v960 = vpack.c.b16 %v956, %v954
  %v987 = vunpack.c.l.b16 %v919
  %v988 = vunpack.c.l.b16 %v920
  %v989 = vunpack.c.l.b16 %v921
  %v990 = vunpack.c.l.b16 %v922
  %v991 = vunpack.c.l.b16 %v923
  %v992 = vunpack.c.l.b16 %v924
  %v993 = vunpack.c.l.b16 %v925
  %v994 = vunpack.c.l.b16 %v926
  %v995 = vunpack.c.l.b16 %v927
  %v996 = vunpack.c.l.b16 %v928
  %v997 = vunpack.c.l.b16 %v929
  %v998 = vunpack.c.l.b16 %v930
  %v999 = vunpack.c.l.b16 %v931
  %v1000 = vunpack.c.l.b16 %v932
  %v1001 = vunpack.c.l.b16 %v933
  %v1002 = vunpack.c.l.b16 %v934
  %v1003 = vunpack.c.l.b16 %v935
  %v1004 = vunpack.c.l.b16 %v936
  %v1005 = vunpack.c.l.b16 %v937
  %v1006 = vunpack.c.l.b16 %v938
  %v1007 = vunpack.c.l.b16 %v939
  %v1008 = vunpack.c.l.b16 %v940
  %v1009 = vunpack.c.l.b16 %v941
  %v1010 = vunpack.c.l.b16 %v942
  %v1011 = vpack.c.b16 %v988, %v987
  %v1012 = vpack.c.b16 %v990, %v989
  %v1013 = vpack.c.b16 %v992, %v991
  %v1014 = vpack.c.b16 %v994, %v993
  %v1015 = vpack.c.b16 %v996, %v995
  %v1016 = vpack.c.b16 %v998, %v997
  %v1017 = vpack.c.b16 %v1000, %v999
  %v1018 = vpack.c.b16 %v1002, %v1001
  %v1019 = vpack.c.b16 %v1004, %v1003
  %v1020 = vpack.c.b16 %v1006, %v1005
  %v1021 = vpack.c.b16 %v1008, %v1007
  %v1022 = vpack.c.b16 %v1010, %v1009
  %v1036 = vsel %vm137, %v958, 0
  %v1039 = vsel %vm137, %v960, 0
  %1041 = vmatpush.bf16.msra.mxu0 %v1018
  %1042 = vmatpush.bf16.msra.mxu0 %v1017
  %1043 = vmatpush.bf16.msra.mxu0 %v1016
  %1044 = vmatpush.bf16.msra.mxu0 %v1015
  %1045 = vmatpush.bf16.msra.mxu0 %v1014
  %1046 = vmatpush.bf16.msra.mxu0 %v1013
  %1047 = vmatpush.bf16.msra.mxu0 %v1012
  %1048 = vmatpush.bf16.msra.mxu0 %v1011
  %1049 = vmatmul.bf16.gmra.mxu0 %v957
  %v1050 = vpop.f32.mrf.mxu0
  %v1051 = vadd.f32 %v944, %v1050
  %v1052 = vpop.f32.mrf.mxu0
  %v1053 = vadd.f32 %v944, %v1052
  %1054 = vmatmul.bf16.gmra.mxu0 %v959
  %v1055 = vpop.f32.mrf.mxu0
  %v1056 = vadd.f32 %v944, %v1055
  %v1057 = vpop.f32.mrf.mxu0
  %v1058 = vadd.f32 %v944, %v1057
  %1059 = vdwg.mxu0
  %1060 = vmatpush.bf16.msra.mxu0 0
  %1061 = vmatpush.bf16.msra.mxu0 0
  %1062 = vmatpush.bf16.msra.mxu0 0
  %1063 = vmatpush.bf16.msra.mxu0 0
  %1064 = vmatpush.bf16.msra.mxu0 %v1022
  %1065 = vmatpush.bf16.msra.mxu0 %v1021
  %1066 = vmatpush.bf16.msra.mxu0 %v1020
  %1067 = vmatpush.bf16.msra.mxu0 %v1019
  %1068 = vmatmul.bf16.gmra.mxu0 %v1036
  %v1069 = vpop.f32.mrf.mxu0
  %v1070 = vadd.f32 %v1051, %v1069
  %v1071 = vpop.f32.mrf.mxu0
  %v1072 = vadd.f32 %v1053, %v1071
  %1073 = vmatmul.bf16.gmra.mxu0 %v1039
  %v1074 = vpop.f32.mrf.mxu0
  %v1075 = vadd.f32 %v1056, %v1074
  %v1076 = vpop.f32.mrf.mxu0
  %v1077 = vadd.f32 %v1058, %v1076
  %1078 = vdwg.mxu0
  %v1079 = vmax.f32 %v1070, 0.0
  %v1080 = vmax.f32 %v1072, 0.0
  %v1081 = vmax.f32 %v1075, 0.0
  %v1082 = vmax.f32 %v1077, 0.0
  %v1083 = vpack.c.bf16 %v1079, %v1079
  %v1084 = vpack.c.bf16 %v1080, %v1080
  %v1085 = vpack.c.bf16 %v1081, %v1081
  %v1086 = vpack.c.bf16 %v1082, %v1082
  %1091 = vrot.lane.b32.xlu0 %v1083, 64
  %v1092 = vpop.permute.xlu0 %1091
  %1093 = vrot.lane.b32.xlu0 %v1084, 64
  %v1094 = vpop.permute.xlu0 %1093
  %1095 = vrot.lane.b32.xlu0 %v1085, 64
  %v1096 = vpop.permute.xlu0 %1095
  %1097 = vrot.lane.b32.xlu0 %v1086, 64
  %v1098 = vpop.permute.xlu0 %1097
  %1103 = vst.msk [vmem:[#allocation2 + $0x4] sm:$0xf] %vm187, %v1092
  %1104 = vst.msk [vmem:[#allocation2 + $0xc] sm:$0xf] %vm187, %v1094
  %1105 = vst.msk [vmem:[#allocation2 + $0x14] sm:$0xf] %vm187, %v1096
  %1106 = vst.msk [vmem:[#allocation2 + $0x1c] sm:$0xf] %vm187, %v1098
  %v1107 = vld [vmem:[#allocation2] sm:$0xff]
  %v1108 = vld [vmem:[#allocation2 + $0x8] sm:$0xff]
  %v1109 = vld [vmem:[#allocation2 + $0x10] sm:$0xff]
  %v1110 = vld [vmem:[#allocation2 + $0x18] sm:$0xff]
  %v1111 = vld [vmem:[%s3 + $0x200] sm:$0xf]
  %v1112 = vld [vmem:[%s3 + $0x204] sm:$0xf]
  %v1113 = vld [vmem:[%s3 + $0x208] sm:$0xf]
  %v1114 = vld [vmem:[%s3 + $0x20c] sm:$0xf]
  %v1115 = vld [vmem:[%s3 + $0x210] sm:$0xf]
  %v1116 = vld [vmem:[%s3 + $0x214] sm:$0xf]
  %v1117 = vld [vmem:[%s3 + $0x218] sm:$0xf]
  %v1118 = vld [vmem:[%s3 + $0x21c] sm:$0xf]
  %v1119 = vld [vmem:[%s3 + $0x220] sm:$0xf]
  %v1120 = vld [vmem:[%s3 + $0x224] sm:$0xf]
  %v1121 = vld [vmem:[%s3 + $0x228] sm:$0xf]
  %v1122 = vld [vmem:[%s3 + $0x22c] sm:$0xf]
  %v1123 = vld [vmem:[%s3 + $0x230] sm:$0xf]
  %v1124 = vld [vmem:[%s3 + $0x234] sm:$0xf]
  %v1125 = vld [vmem:[%s3 + $0x238] sm:$0xf]
  %v1126 = vld [vmem:[%s3 + $0x23c] sm:$0xf]
  %v1127 = vld [vmem:[%s3 + $0x240] sm:$0xf]
  %v1128 = vld [vmem:[%s3 + $0x244] sm:$0xf]
  %v1129 = vld [vmem:[%s3 + $0x248] sm:$0xf]
  %v1130 = vld [vmem:[%s3 + $0x24c] sm:$0xf]
  %v1131 = vld [vmem:[%s3 + $0x250] sm:$0xf]
  %v1132 = vld [vmem:[%s3 + $0x254] sm:$0xf]
  %v1133 = vld [vmem:[%s3 + $0x258] sm:$0xf]
  %v1134 = vld [vmem:[%s3 + $0x25c] sm:$0xf]
  %v1135 = vld [vmem:[%s3 + $0x260] sm:$0xf]
  %v1136 = vld [vmem:[%s3 + $0x264] sm:$0xf]
  %v1137 = vld [vmem:[%s3 + $0x268] sm:$0xf]
  %v1138 = vld [vmem:[%s3 + $0x26c] sm:$0xf]
  %v1139 = vld [vmem:[%s3 + $0x270] sm:$0xf]
  %v1140 = vld [vmem:[%s3 + $0x274] sm:$0xf]
  %v1141 = vld [vmem:[%s3 + $0x278] sm:$0xf]
  %v1142 = vld [vmem:[%s3 + $0x27c] sm:$0xf]
  %v1143 = vld [vmem:[%s4 + $0x7] sm:$0x1]
  %v1144 = vperm.slane %v1143, 0
  %v1149 = vunpack.c.l.b16 %v1107
  %v1150 = vunpack.c.h.b16 %v1107
  %v1151 = vunpack.c.l.b16 %v1108
  %v1152 = vunpack.c.h.b16 %v1108
  %v1153 = vunpack.c.l.b16 %v1109
  %v1154 = vunpack.c.h.b16 %v1109
  %v1155 = vunpack.c.l.b16 %v1110
  %v1156 = vunpack.c.h.b16 %v1110
  %v1157 = vpack.c.b16 %v1151, %v1149
  %v1158 = vpack.c.b16 %v1152, %v1150
  %v1159 = vpack.c.b16 %v1155, %v1153
  %v1160 = vpack.c.b16 %v1156, %v1154
  %v1197 = vunpack.c.l.b16 %v1111
  %v1198 = vunpack.c.l.b16 %v1112
  %v1199 = vunpack.c.l.b16 %v1113
  %v1200 = vunpack.c.l.b16 %v1114
  %v1201 = vunpack.c.l.b16 %v1115
  %v1202 = vunpack.c.l.b16 %v1116
  %v1203 = vunpack.c.l.b16 %v1117
  %v1204 = vunpack.c.l.b16 %v1118
  %v1205 = vunpack.c.l.b16 %v1119
  %v1206 = vunpack.c.l.b16 %v1120
  %v1207 = vunpack.c.l.b16 %v1121
  %v1208 = vunpack.c.l.b16 %v1122
  %v1209 = vunpack.c.l.b16 %v1123
  %v1210 = vunpack.c.l.b16 %v1124
  %v1211 = vunpack.c.l.b16 %v1125
  %v1212 = vunpack.c.l.b16 %v1126
  %v1213 = vunpack.c.l.b16 %v1127
  %v1214 = vunpack.c.l.b16 %v1128
  %v1215 = vunpack.c.l.b16 %v1129
  %v1216 = vunpack.c.l.b16 %v1130
  %v1217 = vunpack.c.l.b16 %v1131
  %v1218 = vunpack.c.l.b16 %v1132
  %v1219 = vunpack.c.l.b16 %v1133
  %v1220 = vunpack.c.l.b16 %v1134
  %v1221 = vunpack.c.l.b16 %v1135
  %v1222 = vunpack.c.l.b16 %v1136
  %v1223 = vunpack.c.l.b16 %v1137
  %v1224 = vunpack.c.l.b16 %v1138
  %v1225 = vunpack.c.l.b16 %v1139
  %v1226 = vunpack.c.l.b16 %v1140
  %v1227 = vunpack.c.l.b16 %v1141
  %v1228 = vunpack.c.l.b16 %v1142
  %v1229 = vpack.c.b16 %v1198, %v1197
  %v1230 = vpack.c.b16 %v1200, %v1199
  %v1231 = vpack.c.b16 %v1202, %v1201
  %v1232 = vpack.c.b16 %v1204, %v1203
  %v1233 = vpack.c.b16 %v1206, %v1205
  %v1234 = vpack.c.b16 %v1208, %v1207
  %v1235 = vpack.c.b16 %v1210, %v1209
  %v1236 = vpack.c.b16 %v1212, %v1211
  %v1237 = vpack.c.b16 %v1214, %v1213
  %v1238 = vpack.c.b16 %v1216, %v1215
  %v1239 = vpack.c.b16 %v1218, %v1217
  %v1240 = vpack.c.b16 %v1220, %v1219
  %v1241 = vpack.c.b16 %v1222, %v1221
  %v1242 = vpack.c.b16 %v1224, %v1223
  %v1243 = vpack.c.b16 %v1226, %v1225
  %v1244 = vpack.c.b16 %v1228, %v1227
  %1261 = vmatpush.bf16.msra.mxu0 %v1236
  %1262 = vmatpush.bf16.msra.mxu0 %v1235
  %1263 = vmatpush.bf16.msra.mxu0 %v1234
  %1264 = vmatpush.bf16.msra.mxu0 %v1233
  %1265 = vmatpush.bf16.msra.mxu0 %v1232
  %1266 = vmatpush.bf16.msra.mxu0 %v1231
  %1267 = vmatpush.bf16.msra.mxu0 %v1230
  %1268 = vmatpush.bf16.msra.mxu0 %v1229
  %1269 = vmatmul.bf16.gmra.mxu0 %v1157
  %v1270 = vpop.f32.mrf.mxu0
  %v1271 = vadd.f32 %v1144, %v1270
  %v1272 = vpop.f32.mrf.mxu0
  %v1273 = vadd.f32 %v1144, %v1272
  %1274 = vmatmul.bf16.gmra.mxu0 %v1159
  %v1275 = vpop.f32.mrf.mxu0
  %v1276 = vadd.f32 %v1144, %v1275
  %v1277 = vpop.f32.mrf.mxu0
  %v1278 = vadd.f32 %v1144, %v1277
  %1279 = vdwg.mxu0
  %1280 = vmatpush.bf16.msra.mxu0 %v1244
  %1281 = vmatpush.bf16.msra.mxu0 %v1243
  %1282 = vmatpush.bf16.msra.mxu0 %v1242
  %1283 = vmatpush.bf16.msra.mxu0 %v1241
  %1284 = vmatpush.bf16.msra.mxu0 %v1240
  %1285 = vmatpush.bf16.msra.mxu0 %v1239
  %1286 = vmatpush.bf16.msra.mxu0 %v1238
  %1287 = vmatpush.bf16.msra.mxu0 %v1237
  %1288 = vmatmul.bf16.gmra.mxu0 %v1158
  %v1289 = vpop.f32.mrf.mxu0
  %v1290 = vadd.f32 %v1271, %v1289
  %v1291 = vpop.f32.mrf.mxu0
  %v1292 = vadd.f32 %v1273, %v1291
  %1293 = vmatmul.bf16.gmra.mxu0 %v1160
  %v1294 = vpop.f32.mrf.mxu0
  %v1295 = vadd.f32 %v1276, %v1294
  %v1296 = vpop.f32.mrf.mxu0
  %v1297 = vadd.f32 %v1278, %v1296
  %1298 = vdwg.mxu0
  %v1299 = vmax.f32 %v1290, 0.0
  %v1300 = vmax.f32 %v1292, 0.0
  %v1301 = vmax.f32 %v1295, 0.0
  %v1302 = vmax.f32 %v1297, 0.0
  %v1303 = vpack.c.bf16 %v1299, %v1299
  %v1304 = vpack.c.bf16 %v1300, %v1300
  %v1305 = vpack.c.bf16 %v1301, %v1301
  %v1306 = vpack.c.bf16 %v1302, %v1302
  %1307 = vst.msk [vmem:[#allocation2] sm:$0xf] %vm84, %v1303
  %1308 = vst.msk [vmem:[#allocation2 + $0x8] sm:$0xf] %vm84, %v1304
  %1309 = vst.msk [vmem:[#allocation2 + $0x10] sm:$0xf] %vm84, %v1305
  %1310 = vst.msk [vmem:[#allocation2 + $0x18] sm:$0xf] %vm84, %v1306
  %v1311 = vld [vmem:[#allocation2] sm:$0xf]
  %v1312 = vld [vmem:[#allocation2 + $0x8] sm:$0xf]
  %v1313 = vld [vmem:[#allocation2 + $0x10] sm:$0xf]
  %v1314 = vld [vmem:[#allocation2 + $0x18] sm:$0xf]
  %v1315 = vld [vmem:[%s3 + $0x280] sm:$0xf]
  %v1316 = vld [vmem:[%s3 + $0x284] sm:$0xf]
  %v1317 = vld [vmem:[%s3 + $0x288] sm:$0xf]
  %v1318 = vld [vmem:[%s3 + $0x28c] sm:$0xf]
  %v1319 = vld [vmem:[%s3 + $0x290] sm:$0xf]
  %v1320 = vld [vmem:[%s3 + $0x294] sm:$0xf]
  %v1321 = vld [vmem:[%s3 + $0x298] sm:$0xf]
  %v1322 = vld [vmem:[%s3 + $0x29c] sm:$0xf]
  %v1323 = vld [vmem:[%s4 + $0x8] sm:$0x1]
  %v1324 = vperm.slane %v1323, 0
  %v1329 = vunpack.c.l.b16 %v1311
  %v1330 = vunpack.c.l.b16 %v1312
  %v1331 = vunpack.c.l.b16 %v1313
  %v1332 = vunpack.c.l.b16 %v1314
  %v1333 = vpack.c.b16 %v1330, %v1329
  %v1334 = vpack.c.b16 %v1332, %v1331
  %v1343 = vunpack.c.l.b16 %v1315
  %v1344 = vunpack.c.l.b16 %v1316
  %v1345 = vunpack.c.l.b16 %v1317
  %v1346 = vunpack.c.l.b16 %v1318
  %v1347 = vunpack.c.l.b16 %v1319
  %v1348 = vunpack.c.l.b16 %v1320
  %v1349 = vunpack.c.l.b16 %v1321
  %v1350 = vunpack.c.l.b16 %v1322
  %v1351 = vpack.c.b16 %v1344, %v1343
  %v1352 = vpack.c.b16 %v1346, %v1345
  %v1353 = vpack.c.b16 %v1348, %v1347
  %v1354 = vpack.c.b16 %v1350, %v1349
  %v1360 = vsel %vm137, %v1333, 0
  %v1363 = vsel %vm137, %v1334, 0
  %1365 = vmatpush.bf16.msra.mxu0 0
  %1366 = vmatpush.bf16.msra.mxu0 0
  %1367 = vmatpush.bf16.msra.mxu0 0
  %1368 = vmatpush.bf16.msra.mxu0 0
  %1369 = vmatpush.bf16.msra.mxu0 %v1354
  %1370 = vmatpush.bf16.msra.mxu0 %v1353
  %1371 = vmatpush.bf16.msra.mxu0 %v1352
  %1372 = vmatpush.bf16.msra.mxu0 %v1351
  %1373 = vmatmul.bf16.gmra.mxu0 %v1360
  %v1374 = vpop.f32.mrf.mxu0
  %v1375 = vadd.f32 %v1324, %v1374
  %v1376 = vpop.f32.mrf.mxu0
  %v1377 = vadd.f32 %v1324, %v1376
  %1378 = vmatmul.bf16.gmra.mxu0 %v1363
  %v1379 = vpop.f32.mrf.mxu0
  %v1380 = vadd.f32 %v1324, %v1379
  %v1381 = vpop.f32.mrf.mxu0
  %v1382 = vadd.f32 %v1324, %v1381
  %1383 = vdwg.mxu0
  %v1384 = vmax.f32 %v1375, 0.0
  %v1385 = vmax.f32 %v1377, 0.0
  %v1386 = vmax.f32 %v1380, 0.0
  %v1387 = vmax.f32 %v1382, 0.0
  %v1388 = vpack.c.bf16 %v1384, %v1384
  %v1389 = vpack.c.bf16 %v1385, %v1385
  %v1390 = vpack.c.bf16 %v1386, %v1386
  %v1391 = vpack.c.bf16 %v1387, %v1387
  %1396 = vrot.lane.b32.xlu0 %v1388, 64
  %v1397 = vpop.permute.xlu0 %1396
  %1398 = vrot.lane.b32.xlu0 %v1389, 64
  %v1399 = vpop.permute.xlu0 %1398
  %1400 = vrot.lane.b32.xlu0 %v1390, 64
  %v1401 = vpop.permute.xlu0 %1400
  %1402 = vrot.lane.b32.xlu0 %v1391, 64
  %v1403 = vpop.permute.xlu0 %1402
  %1408 = vst.msk [vmem:[#allocation2] sm:$0xf] %vm187, %v1397
  %1409 = vst.msk [vmem:[#allocation2 + $0x8] sm:$0xf] %vm187, %v1399
  %1410 = vst.msk [vmem:[#allocation2 + $0x10] sm:$0xf] %vm187, %v1401
  %1411 = vst.msk [vmem:[#allocation2 + $0x18] sm:$0xf] %vm187, %v1403
  %v1412 = vld [vmem:[#allocation2] sm:$0xf]
  %v1413 = vld [vmem:[#allocation2 + $0x8] sm:$0xf]
  %v1414 = vld [vmem:[#allocation2 + $0x10] sm:$0xf]
  %v1415 = vld [vmem:[#allocation2 + $0x18] sm:$0xf]
  %v1416 = vld [vmem:[%s3 + $0x2a0] sm:$0xf]
  %v1417 = vld [vmem:[%s3 + $0x2a4] sm:$0xf]
  %v1418 = vld [vmem:[%s3 + $0x2a8] sm:$0xf]
  %v1419 = vld [vmem:[%s3 + $0x2ac] sm:$0xf]
  %v1420 = vld [vmem:[%s3 + $0x2b0] sm:$0xf]
  %v1421 = vld [vmem:[%s3 + $0x2b4] sm:$0xf]
  %v1422 = vld [vmem:[%s3 + $0x2b8] sm:$0xf]
  %v1423 = vld [vmem:[%s3 + $0x2bc] sm:$0xf]
  %v1424 = vld [vmem:[%s3 + $0x2c0] sm:$0xf]
  %v1425 = vld [vmem:[%s3 + $0x2c4] sm:$0xf]
  %v1426 = vld [vmem:[%s3 + $0x2c8] sm:$0xf]
  %v1427 = vld [vmem:[%s3 + $0x2cc] sm:$0xf]
  %v1428 = vld [vmem:[%s3 + $0x2d0] sm:$0xf]
  %v1429 = vld [vmem:[%s3 + $0x2d4] sm:$0xf]
  %v1430 = vld [vmem:[%s3 + $0x2d8] sm:$0xf]
  %v1431 = vld [vmem:[%s3 + $0x2dc] sm:$0xf]
  %v1432 = vld [vmem:[%s4 + $0x9] sm:$0x1]
  %v1433 = vperm.slane %v1432, 0
  %v1438 = vunpack.c.l.b16 %v1412
  %v1439 = vunpack.c.l.b16 %v1413
  %v1440 = vunpack.c.l.b16 %v1414
  %v1441 = vunpack.c.l.b16 %v1415
  %v1442 = vpack.c.b16 %v1439, %v1438
  %v1443 = vpack.c.b16 %v1441, %v1440
  %v1462 = vunpack.c.l.b16 %v1416
  %v1463 = vunpack.c.l.b16 %v1417
  %v1464 = vunpack.c.l.b16 %v1418
  %v1465 = vunpack.c.l.b16 %v1419
  %v1466 = vunpack.c.l.b16 %v1420
  %v1467 = vunpack.c.l.b16 %v1421
  %v1468 = vunpack.c.l.b16 %v1422
  %v1469 = vunpack.c.l.b16 %v1423
  %v1470 = vunpack.c.l.b16 %v1424
  %v1471 = vunpack.c.l.b16 %v1425
  %v1472 = vunpack.c.l.b16 %v1426
  %v1473 = vunpack.c.l.b16 %v1427
  %v1474 = vunpack.c.l.b16 %v1428
  %v1475 = vunpack.c.l.b16 %v1429
  %v1476 = vunpack.c.l.b16 %v1430
  %v1477 = vunpack.c.l.b16 %v1431
  %v1478 = vpack.c.b16 %v1463, %v1462
  %v1479 = vpack.c.b16 %v1465, %v1464
  %v1480 = vpack.c.b16 %v1467, %v1466
  %v1481 = vpack.c.b16 %v1469, %v1468
  %v1482 = vpack.c.b16 %v1471, %v1470
  %v1483 = vpack.c.b16 %v1473, %v1472
  %v1484 = vpack.c.b16 %v1475, %v1474
  %v1485 = vpack.c.b16 %v1477, %v1476
  %1494 = vmatpush.bf16.msra.mxu0 %v1485
  %1495 = vmatpush.bf16.msra.mxu0 %v1484
  %1496 = vmatpush.bf16.msra.mxu0 %v1483
  %1497 = vmatpush.bf16.msra.mxu0 %v1482
  %1498 = vmatpush.bf16.msra.mxu0 %v1481
  %1499 = vmatpush.bf16.msra.mxu0 %v1480
  %1500 = vmatpush.bf16.msra.mxu0 %v1479
  %1501 = vmatpush.bf16.msra.mxu0 %v1478
  %1502 = vmatmul.bf16.gmra.mxu0 %v1442
  %v1503 = vpop.f32.mrf.mxu0
  %v1504 = vadd.f32 %v1433, %v1503
  %v1505 = vpop.f32.mrf.mxu0
  %v1506 = vadd.f32 %v1433, %v1505
  %1507 = vmatmul.bf16.gmra.mxu0 %v1443
  %v1508 = vpop.f32.mrf.mxu0
  %v1509 = vadd.f32 %v1433, %v1508
  %v1510 = vpop.f32.mrf.mxu0
  %v1511 = vadd.f32 %v1433, %v1510
  %1512 = vdwg.mxu0
  %v1513 = vmax.f32 %v1504, 0.0
  %v1514 = vmax.f32 %v1506, 0.0
  %v1515 = vmax.f32 %v1509, 0.0
  %v1516 = vmax.f32 %v1511, 0.0
  %v1517 = vpack.c.bf16 %v1513, %v1513
  %v1518 = vpack.c.bf16 %v1514, %v1514
  %v1519 = vpack.c.bf16 %v1515, %v1515
  %v1520 = vpack.c.bf16 %v1516, %v1516
  %1521 = vst.msk [vmem:[#allocation2 + $0x4] sm:$0xf] %vm84, %v1517
  %1522 = vst.msk [vmem:[#allocation2 + $0xc] sm:$0xf] %vm84, %v1518
  %1523 = vst.msk [vmem:[#allocation2 + $0x14] sm:$0xf] %vm84, %v1519
  %1524 = vst.msk [vmem:[#allocation2 + $0x1c] sm:$0xf] %vm84, %v1520
  %v1525 = vld [vmem:[#allocation2] sm:$0xff]
  %v1526 = vld [vmem:[#allocation2 + $0x8] sm:$0xff]
  %v1527 = vld [vmem:[#allocation2 + $0x10] sm:$0xff]
  %v1528 = vld [vmem:[#allocation2 + $0x18] sm:$0xff]
  %v1529 = vld [vmem:[%s3 + $0x2e0] sm:$0xf]
  %v1530 = vld [vmem:[%s3 + $0x2e4] sm:$0xf]
  %v1531 = vld [vmem:[%s3 + $0x2e8] sm:$0xf]
  %v1532 = vld [vmem:[%s3 + $0x2ec] sm:$0xf]
  %v1533 = vld [vmem:[%s3 + $0x2f0] sm:$0xf]
  %v1534 = vld [vmem:[%s3 + $0x2f4] sm:$0xf]
  %v1535 = vld [vmem:[%s3 + $0x2f8] sm:$0xf]
  %v1536 = vld [vmem:[%s3 + $0x2fc] sm:$0xf]
  %v1537 = vld [vmem:[%s3 + $0x300] sm:$0xf]
  %v1538 = vld [vmem:[%s3 + $0x304] sm:$0xf]
  %v1539 = vld [vmem:[%s3 + $0x308] sm:$0xf]
  %v1540 = vld [vmem:[%s3 + $0x30c] sm:$0xf]
  %v1541 = vld [vmem:[%s3 + $0x310] sm:$0xf]
  %v1542 = vld [vmem:[%s3 + $0x314] sm:$0xf]
  %v1543 = vld [vmem:[%s3 + $0x318] sm:$0xf]
  %v1544 = vld [vmem:[%s3 + $0x31c] sm:$0xf]
  %v1545 = vld [vmem:[%s3 + $0x320] sm:$0xf]
  %v1546 = vld [vmem:[%s3 + $0x324] sm:$0xf]
  %v1547 = vld [vmem:[%s3 + $0x328] sm:$0xf]
  %v1548 = vld [vmem:[%s3 + $0x32c] sm:$0xf]
  %v1549 = vld [vmem:[%s3 + $0x330] sm:$0xf]
  %v1550 = vld [vmem:[%s3 + $0x334] sm:$0xf]
  %v1551 = vld [vmem:[%s3 + $0x338] sm:$0xf]
  %v1552 = vld [vmem:[%s3 + $0x33c] sm:$0xf]
  %v1553 = vld [vmem:[%s4 + $0xa] sm:$0x1]
  %v1554 = vperm.slane %v1553, 0
  %v1559 = vunpack.c.l.b16 %v1525
  %v1560 = vunpack.c.h.b16 %v1525
  %v1561 = vunpack.c.l.b16 %v1526
  %v1562 = vunpack.c.h.b16 %v1526
  %v1563 = vunpack.c.l.b16 %v1527
  %v1564 = vunpack.c.h.b16 %v1527
  %v1565 = vunpack.c.l.b16 %v1528
  %v1566 = vunpack.c.h.b16 %v1528
  %v1567 = vpack.c.b16 %v1561, %v1559
  %v1568 = vpack.c.b16 %v1562, %v1560
  %v1569 = vpack.c.b16 %v1565, %v1563
  %v1570 = vpack.c.b16 %v1566, %v1564
  %v1597 = vunpack.c.l.b16 %v1529
  %v1598 = vunpack.c.l.b16 %v1530
  %v1599 = vunpack.c.l.b16 %v1531
  %v1600 = vunpack.c.l.b16 %v1532
  %v1601 = vunpack.c.l.b16 %v1533
  %v1602 = vunpack.c.l.b16 %v1534
  %v1603 = vunpack.c.l.b16 %v1535
  %v1604 = vunpack.c.l.b16 %v1536
  %v1605 = vunpack.c.l.b16 %v1537
  %v1606 = vunpack.c.l.b16 %v1538
  %v1607 = vunpack.c.l.b16 %v1539
  %v1608 = vunpack.c.l.b16 %v1540
  %v1609 = vunpack.c.l.b16 %v1541
  %v1610 = vunpack.c.l.b16 %v1542
  %v1611 = vunpack.c.l.b16 %v1543
  %v1612 = vunpack.c.l.b16 %v1544
  %v1613 = vunpack.c.l.b16 %v1545
  %v1614 = vunpack.c.l.b16 %v1546
  %v1615 = vunpack.c.l.b16 %v1547
  %v1616 = vunpack.c.l.b16 %v1548
  %v1617 = vunpack.c.l.b16 %v1549
  %v1618 = vunpack.c.l.b16 %v1550
  %v1619 = vunpack.c.l.b16 %v1551
  %v1620 = vunpack.c.l.b16 %v1552
  %v1621 = vpack.c.b16 %v1598, %v1597
  %v1622 = vpack.c.b16 %v1600, %v1599
  %v1623 = vpack.c.b16 %v1602, %v1601
  %v1624 = vpack.c.b16 %v1604, %v1603
  %v1625 = vpack.c.b16 %v1606, %v1605
  %v1626 = vpack.c.b16 %v1608, %v1607
  %v1627 = vpack.c.b16 %v1610, %v1609
  %v1628 = vpack.c.b16 %v1612, %v1611
  %v1629 = vpack.c.b16 %v1614, %v1613
  %v1630 = vpack.c.b16 %v1616, %v1615
  %v1631 = vpack.c.b16 %v1618, %v1617
  %v1632 = vpack.c.b16 %v1620, %v1619
  %v1646 = vsel %vm137, %v1568, 0
  %v1649 = vsel %vm137, %v1570, 0
  %1651 = vmatpush.bf16.msra.mxu0 %v1628
  %1652 = vmatpush.bf16.msra.mxu0 %v1627
  %1653 = vmatpush.bf16.msra.mxu0 %v1626
  %1654 = vmatpush.bf16.msra.mxu0 %v1625
  %1655 = vmatpush.bf16.msra.mxu0 %v1624
  %1656 = vmatpush.bf16.msra.mxu0 %v1623
  %1657 = vmatpush.bf16.msra.mxu0 %v1622
  %1658 = vmatpush.bf16.msra.mxu0 %v1621
  %1659 = vmatmul.bf16.gmra.mxu0 %v1567
  %v1660 = vpop.f32.mrf.mxu0
  %v1661 = vadd.f32 %v1554, %v1660
  %v1662 = vpop.f32.mrf.mxu0
  %v1663 = vadd.f32 %v1554, %v1662
  %1664 = vmatmul.bf16.gmra.mxu0 %v1569
  %v1665 = vpop.f32.mrf.mxu0
  %v1666 = vadd.f32 %v1554, %v1665
  %v1667 = vpop.f32.mrf.mxu0
  %v1668 = vadd.f32 %v1554, %v1667
  %1669 = vdwg.mxu0
  %1670 = vmatpush.bf16.msra.mxu0 0
  %1671 = vmatpush.bf16.msra.mxu0 0
  %1672 = vmatpush.bf16.msra.mxu0 0
  %1673 = vmatpush.bf16.msra.mxu0 0
  %1674 = vmatpush.bf16.msra.mxu0 %v1632
  %1675 = vmatpush.bf16.msra.mxu0 %v1631
  %1676 = vmatpush.bf16.msra.mxu0 %v1630
  %1677 = vmatpush.bf16.msra.mxu0 %v1629
  %1678 = vmatmul.bf16.gmra.mxu0 %v1646
  %v1679 = vpop.f32.mrf.mxu0
  %v1680 = vadd.f32 %v1661, %v1679
  %v1681 = vpop.f32.mrf.mxu0
  %v1682 = vadd.f32 %v1663, %v1681
  %1683 = vmatmul.bf16.gmra.mxu0 %v1649
  %v1684 = vpop.f32.mrf.mxu0
  %v1685 = vadd.f32 %v1666, %v1684
  %v1686 = vpop.f32.mrf.mxu0
  %v1687 = vadd.f32 %v1668, %v1686
  %1688 = vdwg.mxu0
  %v1689 = vmax.f32 %v1680, 0.0
  %v1690 = vmax.f32 %v1682, 0.0
  %v1691 = vmax.f32 %v1685, 0.0
  %v1692 = vmax.f32 %v1687, 0.0
  %v1693 = vpack.c.bf16 %v1689, %v1689
  %v1694 = vpack.c.bf16 %v1690, %v1690
  %v1695 = vpack.c.bf16 %v1691, %v1691
  %v1696 = vpack.c.bf16 %v1692, %v1692
  %1701 = vrot.lane.b32.xlu0 %v1693, 64
  %v1702 = vpop.permute.xlu0 %1701
  %1703 = vrot.lane.b32.xlu0 %v1694, 64
  %v1704 = vpop.permute.xlu0 %1703
  %1705 = vrot.lane.b32.xlu0 %v1695, 64
  %v1706 = vpop.permute.xlu0 %1705
  %1707 = vrot.lane.b32.xlu0 %v1696, 64
  %v1708 = vpop.permute.xlu0 %1707
  %1713 = vst.msk [vmem:[#allocation2 + $0x4] sm:$0xf] %vm187, %v1702
  %1714 = vst.msk [vmem:[#allocation2 + $0xc] sm:$0xf] %vm187, %v1704
  %1715 = vst.msk [vmem:[#allocation2 + $0x14] sm:$0xf] %vm187, %v1706
  %1716 = vst.msk [vmem:[#allocation2 + $0x1c] sm:$0xf] %vm187, %v1708
  %v1717 = vld [vmem:[#allocation2] sm:$0xff]
  %v1718 = vld [vmem:[#allocation2 + $0x8] sm:$0xff]
  %v1719 = vld [vmem:[#allocation2 + $0x10] sm:$0xff]
  %v1720 = vld [vmem:[#allocation2 + $0x18] sm:$0xff]
  %v1721 = vld [vmem:[%s3 + $0x340] sm:$0xf]
  %v1722 = vld [vmem:[%s3 + $0x344] sm:$0xf]
  %v1723 = vld [vmem:[%s3 + $0x348] sm:$0xf]
  %v1724 = vld [vmem:[%s3 + $0x34c] sm:$0xf]
  %v1725 = vld [vmem:[%s3 + $0x350] sm:$0xf]
  %v1726 = vld [vmem:[%s3 + $0x354] sm:$0xf]
  %v1727 = vld [vmem:[%s3 + $0x358] sm:$0xf]
  %v1728 = vld [vmem:[%s3 + $0x35c] sm:$0xf]
  %v1729 = vld [vmem:[%s3 + $0x360] sm:$0xf]
  %v1730 = vld [vmem:[%s3 + $0x364] sm:$0xf]
  %v1731 = vld [vmem:[%s3 + $0x368] sm:$0xf]
  %v1732 = vld [vmem:[%s3 + $0x36c] sm:$0xf]
  %v1733 = vld [vmem:[%s3 + $0x370] sm:$0xf]
  %v1734 = vld [vmem:[%s3 + $0x374] sm:$0xf]
  %v1735 = vld [vmem:[%s3 + $0x378] sm:$0xf]
  %v1736 = vld [vmem:[%s3 + $0x37c] sm:$0xf]
  %v1737 = vld [vmem:[%s3 + $0x380] sm:$0xf]
  %v1738 = vld [vmem:[%s3 + $0x384] sm:$0xf]
  %v1739 = vld [vmem:[%s3 + $0x388] sm:$0xf]
  %v1740 = vld [vmem:[%s3 + $0x38c] sm:$0xf]
  %v1741 = vld [vmem:[%s3 + $0x390] sm:$0xf]
  %v1742 = vld [vmem:[%s3 + $0x394] sm:$0xf]
  %v1743 = vld [vmem:[%s3 + $0x398] sm:$0xf]
  %v1744 = vld [vmem:[%s3 + $0x39c] sm:$0xf]
  %v1745 = vld [vmem:[%s3 + $0x3a0] sm:$0xf]
  %v1746 = vld [vmem:[%s3 + $0x3a4] sm:$0xf]
  %v1747 = vld [vmem:[%s3 + $0x3a8] sm:$0xf]
  %v1748 = vld [vmem:[%s3 + $0x3ac] sm:$0xf]
  %v1749 = vld [vmem:[%s3 + $0x3b0] sm:$0xf]
  %v1750 = vld [vmem:[%s3 + $0x3b4] sm:$0xf]
  %v1751 = vld [vmem:[%s3 + $0x3b8] sm:$0xf]
  %v1752 = vld [vmem:[%s3 + $0x3bc] sm:$0xf]
  %v1753 = vld [vmem:[%s4 + $0xb] sm:$0x1]
  %v1754 = vperm.slane %v1753, 0
  %v1759 = vunpack.c.l.b16 %v1717
  %v1760 = vunpack.c.h.b16 %v1717
  %v1761 = vunpack.c.l.b16 %v1718
  %v1762 = vunpack.c.h.b16 %v1718
  %v1763 = vunpack.c.l.b16 %v1719
  %v1764 = vunpack.c.h.b16 %v1719
  %v1765 = vunpack.c.l.b16 %v1720
  %v1766 = vunpack.c.h.b16 %v1720
  %v1767 = vpack.c.b16 %v1761, %v1759
  %v1768 = vpack.c.b16 %v1762, %v1760
  %v1769 = vpack.c.b16 %v1765, %v1763
  %v1770 = vpack.c.b16 %v1766, %v1764
  %v1807 = vunpack.c.l.b16 %v1721
  %v1808 = vunpack.c.l.b16 %v1722
  %v1809 = vunpack.c.l.b16 %v1723
  %v1810 = vunpack.c.l.b16 %v1724
  %v1811 = vunpack.c.l.b16 %v1725
  %v1812 = vunpack.c.l.b16 %v1726
  %v1813 = vunpack.c.l.b16 %v1727
  %v1814 = vunpack.c.l.b16 %v1728
  %v1815 = vunpack.c.l.b16 %v1729
  %v1816 = vunpack.c.l.b16 %v1730
  %v1817 = vunpack.c.l.b16 %v1731
  %v1818 = vunpack.c.l.b16 %v1732
  %v1819 = vunpack.c.l.b16 %v1733
  %v1820 = vunpack.c.l.b16 %v1734
  %v1821 = vunpack.c.l.b16 %v1735
  %v1822 = vunpack.c.l.b16 %v1736
  %v1823 = vunpack.c.l.b16 %v1737
  %v1824 = vunpack.c.l.b16 %v1738
  %v1825 = vunpack.c.l.b16 %v1739
  %v1826 = vunpack.c.l.b16 %v1740
  %v1827 = vunpack.c.l.b16 %v1741
  %v1828 = vunpack.c.l.b16 %v1742
  %v1829 = vunpack.c.l.b16 %v1743
  %v1830 = vunpack.c.l.b16 %v1744
  %v1831 = vunpack.c.l.b16 %v1745
  %v1832 = vunpack.c.l.b16 %v1746
  %v1833 = vunpack.c.l.b16 %v1747
  %v1834 = vunpack.c.l.b16 %v1748
  %v1835 = vunpack.c.l.b16 %v1749
  %v1836 = vunpack.c.l.b16 %v1750
  %v1837 = vunpack.c.l.b16 %v1751
  %v1838 = vunpack.c.l.b16 %v1752
  %v1839 = vpack.c.b16 %v1808, %v1807
  %v1840 = vpack.c.b16 %v1810, %v1809
  %v1841 = vpack.c.b16 %v1812, %v1811
  %v1842 = vpack.c.b16 %v1814, %v1813
  %v1843 = vpack.c.b16 %v1816, %v1815
  %v1844 = vpack.c.b16 %v1818, %v1817
  %v1845 = vpack.c.b16 %v1820, %v1819
  %v1846 = vpack.c.b16 %v1822, %v1821
  %v1847 = vpack.c.b16 %v1824, %v1823
  %v1848 = vpack.c.b16 %v1826, %v1825
  %v1849 = vpack.c.b16 %v1828, %v1827
  %v1850 = vpack.c.b16 %v1830, %v1829
  %v1851 = vpack.c.b16 %v1832, %v1831
  %v1852 = vpack.c.b16 %v1834, %v1833
  %v1853 = vpack.c.b16 %v1836, %v1835
  %v1854 = vpack.c.b16 %v1838, %v1837
  %1871 = vmatpush.bf16.msra.mxu0 %v1846
  %1872 = vmatpush.bf16.msra.mxu0 %v1845
  %1873 = vmatpush.bf16.msra.mxu0 %v1844
  %1874 = vmatpush.bf16.msra.mxu0 %v1843
  %1875 = vmatpush.bf16.msra.mxu0 %v1842
  %1876 = vmatpush.bf16.msra.mxu0 %v1841
  %1877 = vmatpush.bf16.msra.mxu0 %v1840
  %1878 = vmatpush.bf16.msra.mxu0 %v1839
  %1879 = vmatmul.bf16.gmra.mxu0 %v1767
  %v1880 = vpop.f32.mrf.mxu0
  %v1881 = vadd.f32 %v1754, %v1880
  %v1882 = vpop.f32.mrf.mxu0
  %v1883 = vadd.f32 %v1754, %v1882
  %1884 = vmatmul.bf16.gmra.mxu0 %v1769
  %v1885 = vpop.f32.mrf.mxu0
  %v1886 = vadd.f32 %v1754, %v1885
  %v1887 = vpop.f32.mrf.mxu0
  %v1888 = vadd.f32 %v1754, %v1887
  %1889 = vdwg.mxu0
  %1890 = vmatpush.bf16.msra.mxu0 %v1854
  %1891 = vmatpush.bf16.msra.mxu0 %v1853
  %1892 = vmatpush.bf16.msra.mxu0 %v1852
  %1893 = vmatpush.bf16.msra.mxu0 %v1851
  %1894 = vmatpush.bf16.msra.mxu0 %v1850
  %1895 = vmatpush.bf16.msra.mxu0 %v1849
  %1896 = vmatpush.bf16.msra.mxu0 %v1848
  %1897 = vmatpush.bf16.msra.mxu0 %v1847
  %1898 = vmatmul.bf16.gmra.mxu0 %v1768
  %v1899 = vpop.f32.mrf.mxu0
  %v1900 = vadd.f32 %v1881, %v1899
  %v1901 = vpop.f32.mrf.mxu0
  %v1902 = vadd.f32 %v1883, %v1901
  %1903 = vmatmul.bf16.gmra.mxu0 %v1770
  %v1904 = vpop.f32.mrf.mxu0
  %v1905 = vadd.f32 %v1886, %v1904
  %v1906 = vpop.f32.mrf.mxu0
  %v1907 = vadd.f32 %v1888, %v1906
  %1908 = vdwg.mxu0
  %v1909 = vmax.f32 %v1900, 0.0
  %v1910 = vmax.f32 %v1902, 0.0
  %v1911 = vmax.f32 %v1905, 0.0
  %v1912 = vmax.f32 %v1907, 0.0
  %v1913 = vsel %vm137, %v1909, 0.0
  %v1914 = vsel %vm137, %v1910, 0.0
  %v1915 = vadd.f32 %v1913, %v1914
  %v1916 = vrot.slane %v1915, 4
  %v1917 = vadd.f32 %v1915, %v1916
  %v1918 = vrot.slane %v1917, 2
  %v1919 = vadd.f32 %v1917, %v1918
  %v1920 = vrot.slane %v1919, 1
  %v1921 = vadd.f32 %v1919, %v1920
  %v1922 = vsel %vm137, %v1911, 0.0
  %v1923 = vsel %vm137, %v1912, 0.0
  %v1924 = vadd.f32 %v1922, %v1923
  %v1925 = vrot.slane %v1924, 4
  %v1926 = vadd.f32 %v1924, %v1925
  %v1927 = vrot.slane %v1926, 2
  %v1928 = vadd.f32 %v1926, %v1927
  %v1929 = vrot.slane %v1928, 1
  %v1930 = vadd.f32 %v1928, %v1929
  %v1931 = vrcp.pop 16.0
  %v1932 = vmul.f32 16.0, %v1931
  %v1933 = vsub.f32 1.0, %v1932
  %v1934 = vmul.f32 %v1931, %v1933
  %v1935 = vadd.f32 %v1931, %v1934
  %vm1936 = vweird.f32 %v1931
  %v1937 = vsel %vm1936, %v1931, %v1935
  %v1938 = vmul.f32 %v1921, %v1937
  %v1939 = vmul.f32 %v1930, %v1937
  %vm1942 = vcmask 1041409
  %v1943 = vsel %vm1942, %v1939, %v1938
  %vm1945 = vcmask 517120
  %1946 = vst.msk [vmem:[%s5] sm:$0x3] %vm1945, %v1943
  // Predicated region
  $region22: #{deepfake_forward.1} parent=0 // pred_check
    _
  $region23: #{deepfake_forward.1} parent=0 // pred_check_branch
    %1948 = sbr.rel (0) target = $region25
  $region24: #{deepfake_forward.1} parent=0 // pred_region
    _
  $region25: #{deepfake_forward.1} parent=0 // pred_fallthru
    _
  // Predicated region
  $region26: #{deepfake_forward.1} parent=0 // pred_check
    _
  $region27: #{deepfake_forward.1} parent=0 // pred_check_branch
    %1950 = sbr.rel (0) target = $region29
  $region28: #{deepfake_forward.1} parent=0 // pred_region
    _
  $region29: #{deepfake_forward.1} parent=0 // pred_fallthru
    _

</llo_original>
